<compile_context>
chip_gen: v6e
topology: v6e:2x2x1
jax: 0.10.0
libtpu: 0.0.40
codegen_flags: <defaults>
</compile_context>

<pallas_src>
import functools

import numpy as np
import jax
import jax.numpy as jnp
from jax import lax
from jax.experimental import pallas as pl
from jax.experimental.pallas import tpu as pltpu

STD_MIN = 1.0
_LANE = 128      # TPU lane width == D-chunk size
_SUBLANE = 8
_LOG_GROUP = 8   # lanes folded into one VPU product per EUP log (8x fewer vlog)
# TODO(synk): set True on v6e/v7x for ~2x EUP rate (bf16 log inputs) at ~3
# digits accuracy loss; leave False on v5e (no bf16 EUP/VPU) and for accuracy.
_BF16_EUP_INPUTS = False


def _ceil_to(x, m):
    return ((x + m - 1) // m) * m


# ---------------------------------------------------------------------------
# Fused, tiled GMM-overlap kernel:
#   G_x[c,c'] = sum_{i in c, j in c'} w_i w_j N(mu_i; mu_j, Sx_i + Sx_j)
#   G_h[c,c'] = same with the h_std variances.
# ---------------------------------------------------------------------------
def _fused_overlap_kernel(mi_ref, mj_ref, vxi_ref, vxj_ref, vhi_ref, vhj_ref,
                          ati_ref, atj_ref, gx_ref, gh_ref, sx_ref, sh_ref,
                          *, log_norm_const, dc, i_full_d):
    j = pl.program_id(1)
    d = pl.program_id(2)
    nd = pl.num_programs(2)

    # Output tile (per i-block) is resident across the whole (j, d) sub-loop.
    @pl.when(jnp.logical_and(j == 0, d == 0))
    def _():
        gx_ref[...] = jnp.zeros_like(gx_ref)
        gh_ref[...] = jnp.zeros_like(gh_ref)

    # log-kernel accumulators, reduced over the d (feature-chunk) axis.
    @pl.when(d == 0)
    def _():
        sx_ref[...] = jnp.zeros_like(sx_ref)
        sh_ref[...] = jnp.zeros_like(sh_ref)

    if i_full_d:
        # i-side slabs are full-D resident; slice the current d chunk.
        doff = pl.multiple_of(d * dc, dc)
        mi = mi_ref[:, pl.ds(doff, dc)]
        vxi = vxi_ref[:, pl.ds(doff, dc)]
        vhi = vhi_ref[:, pl.ds(doff, dc)]
    else:
        mi, vxi, vhi = mi_ref[...], vxi_ref[...], vhi_ref[...]

    mj = mj_ref[...]                                   # (TNJ, DC)
    diff = mi[:, None, :] - mj[None, :, :]             # (TNI, TNJ, DC)
    d2 = diff * diff                                   # shared by both slabs

    def log_sum(v):
        # sum(log(v), axis=-1) with _LOG_GROUP x fewer EUP logs: fold groups of
        # lanes into VPU products first (grouping is free: sum of logs).
        seg = dc // _LOG_GROUP
        p = v[..., 0:seg]
        for g in range(1, _LOG_GROUP):
            p = p * v[..., g * seg:(g + 1) * seg]
        if _BF16_EUP_INPUTS:
            p = p.astype(jnp.bfloat16)
        return jnp.sum(jnp.log(p).astype(jnp.float32), axis=-1)

    def recip(v):
        r = pl.reciprocal(v, approx=True)      # EUP vrcp (free slot)
        return r * (2.0 - v * r)               # one Newton step (VPU slack)

    vx = vxi[:, None, :] + vxj_ref[...][None, :, :]
    sx_ref[...] += jnp.sum(d2 * recip(vx), axis=-1) + log_sum(vx)

    vh = vhi[:, None, :] + vhj_ref[...][None, :, :]
    sh_ref[...] += jnp.sum(d2 * recip(vh), axis=-1) + log_sum(vh)

    # Finalize: exponentiate once per (i,j) pair and fold into G via the MXU.
    @pl.when(d == nd - 1)
    def _():
        kx = jnp.exp(-0.5 * sx_ref[...] + log_norm_const)    # (TNI, TNJ)
        kh = jnp.exp(-0.5 * sh_ref[...] + log_norm_const)
        a_ti = ati_ref[...]                                   # (TNI, CP) = A_i^T
        a_tj = atj_ref[...]                                   # (TNJ, CP) = A_j^T
        # Reuse the A_i^T MXU operand across both slabs: single first-stage
        # matmul on the lane-concatenated [kx | kh].
        k_cat = jnp.concatenate([kx, kh], axis=-1)            # (TNI, 2*TNJ)
        t = lax.dot_general(a_ti, k_cat, (((0,), (0,)), ((), ())),
                            preferred_element_type=jnp.float32)  # (CP, 2*TNJ)
        tnj = kx.shape[1]
        gx_ref[...] += jnp.dot(t[:, :tnj], a_tj,
                               preferred_element_type=jnp.float32)
        gh_ref[...] += jnp.dot(t[:, tnj:], a_tj,
                               preferred_element_type=jnp.float32)


def _gmm_overlap_fused(mean_flat, var_x, var_h, a_t, *, C, D):
    """Returns (G_x, G_h), each (C, C) float32. a_t is A^T, shape (N, C)."""
    N = mean_flat.shape[0]
    D_pad = _ceil_to(max(D, 1), _LANE)
    C_pad = _ceil_to(C, _SUBLANE)
    dc = _LANE

    if N > 128:
        # Lane-dense pair tile: TNJ=128 (lane axis of sx/sh/kx/kh and the MXU
        # contraction); TNI=64 keeps 3-D temps at 4 MiB and makes n_i >= 2.
        tni, tnj = 64, 128
        n_pad = _ceil_to(N, 128)
    else:
        tnj = _ceil_to(N, _SUBLANE)            # single block on the j axis
        tni = tnj // 2 if tnj % 16 == 0 else tnj   # n_i >= 2 when possible
        n_pad = tnj
    n_i, n_j, n_d = n_pad // tni, n_pad // tnj, D_pad // dc

    # Hoist the i-side slabs to full-D residency (fetched once per i instead
    # of once per (i, j, d)); skip only for very large D to bound VMEM.
    i_full_d = D_pad <= 2048

    # Neutral padding: mean 0 and variance 0.5 so padded lanes give
    # diff^2/v = 0 and log(v) = log(1) = 0; padded rows carry zero weight in A.
    mean_p = jnp.zeros((n_pad, D_pad), jnp.float32).at[:N, :D].set(mean_flat)
    var_x_p = jnp.full((n_pad, D_pad), 0.5, jnp.float32).at[:N, :D].set(var_x)
    var_h_p = jnp.full((n_pad, D_pad), 0.5, jnp.float32).at[:N, :D].set(var_h)
    a_t_p = jnp.zeros((n_pad, C_pad), jnp.float32).at[:N, :C].set(a_t)

    log_norm_const = -0.5 * float(D) * float(np.log(2.0 * np.pi))
    kernel = functools.partial(_fused_overlap_kernel,
                               log_norm_const=log_norm_const,
                               dc=dc, i_full_d=i_full_d)

    elem = n_pad * n_pad * D_pad
    cost = pl.CostEstimate(
        flops=int(18 * elem
                  + 2 * n_i * n_j * (C_pad * tni * 2 * tnj
                                     + 2 * C_pad * tnj * C_pad)),
        transcendentals=int(n_pad * n_pad
                            * (2 * D_pad + 2 * (D_pad // _LOG_GROUP) + 2)),
        bytes_accessed=int(4 * (3 * n_pad * D_pad * (1 if i_full_d else n_j)
                                + 3 * n_pad * D_pad * n_i
                                + n_pad * C_pad * (1 + n_i)
                                + 2 * n_i * C_pad * C_pad)),
    )

    if i_full_d:
        def i_spec():
            return pl.BlockSpec((tni, D_pad), lambda i, j, d: (i, 0))
    else:
        def i_spec():
            return pl.BlockSpec((tni, dc), lambda i, j, d: (i, d))

    def j_spec():
        return pl.BlockSpec((tnj, dc), lambda i, j, d: (j, d))

    gx_part, gh_part = pl.pallas_call(
        kernel,
        out_shape=(jax.ShapeDtypeStruct((n_i, C_pad, C_pad), jnp.float32),
                   jax.ShapeDtypeStruct((n_i, C_pad, C_pad), jnp.float32)),
        grid_spec=pltpu.PrefetchScalarGridSpec(
            num_scalar_prefetch=0,
            grid=(n_i, n_j, n_d),
            in_specs=[
                i_spec(), j_spec(),    # mean_i, mean_j
                i_spec(), j_spec(),    # var_x_i, var_x_j
                i_spec(), j_spec(),    # var_h_i, var_h_j
                pl.BlockSpec((tni, C_pad), lambda i, j, d: (i, 0)),   # A_i^T
                pl.BlockSpec((tnj, C_pad), lambda i, j, d: (j, 0)),   # A_j^T
            ],
            out_specs=(
                pl.BlockSpec((None, C_pad, C_pad), lambda i, j, d: (i, 0, 0)),
                pl.BlockSpec((None, C_pad, C_pad), lambda i, j, d: (i, 0, 0)),
            ),
            scratch_shapes=[pltpu.VMEM((tni, tnj), jnp.float32),
                            pltpu.VMEM((tni, tnj), jnp.float32)],
        ),
        compiler_params=pltpu.CompilerParams(
            dimension_semantics=("parallel", "arbitrary", "arbitrary"),
            vmem_limit_bytes=40 * 1024 * 1024),
        cost_estimate=cost,
    )(mean_p, mean_p, var_x_p, var_x_p, var_h_p, var_h_p, a_t_p, a_t_p)

    g_x = jnp.sum(gx_part, axis=0)[:C, :C]
    g_h = jnp.sum(gh_part, axis=0)[:C, :C]
    return g_x, g_h


# ---------------------------------------------------------------------------
# Jitted forward pipeline (parameters -> SED / CCNS arrays), one dispatch.
# ---------------------------------------------------------------------------
@functools.partial(jax.jit, static_argnames=("C", "M", "D"))
def _forward_arrays(k, epsilon, sigma, prior, weights, mean, std, *, C, M, D):
    # --- get_parameters ---
    epsilon = jnp.abs(epsilon)
    prior = jnp.abs(prior)
    prior = prior / jnp.maximum(jnp.sum(prior, axis=-1, keepdims=True), 1e-12)
    weights = jnp.abs(weights)
    weights = weights / jnp.maximum(jnp.sum(weights, axis=-1, keepdims=True), 1e-12)
    std = jnp.abs(std) + STD_MIN

    N = C * M
    mean_flat = mean.reshape(N, D).astype(jnp.float32)
    var_x = (std ** 2).reshape(N, D).astype(jnp.float32)

    # lambda_epsilon = sigma^2 / (relu(k) + 1);  h_std = std + sqrt(lambda_eps)
    lam = (sigma ** 2) / (jax.nn.relu(k) + 1.0)          # (1,)
    h_std = std + jnp.sqrt(lam)
    var_h = (h_std ** 2).reshape(N, D).astype(jnp.float32)

    # Transposed class-membership scaled by mixture weights:
    #   A^T[c*M+m, c'] = w[c, m] * [c' == c]
    a_t = (jnp.kron(jnp.eye(C, dtype=jnp.float32),
                    jnp.ones((M, 1), jnp.float32))
           * weights.reshape(-1)[:, None].astype(jnp.float32))        # (N, C)

    g_x, g_h = _gmm_overlap_fused(mean_flat, var_x, var_h, a_t, C=C, D=D)

    # SED(p_c, p_c') = <p_c,p_c> + <p_c',p_c'> - 2 <p_c,p_c'>
    diag_x = jnp.diag(g_x)
    diag_h = jnp.diag(g_h)
    sed_x_mat = diag_x[:, None] + diag_x[None, :] - 2.0 * g_x
    sed_h_mat = diag_h[:, None] + diag_h[None, :] - 2.0 * g_h

    # CCNS lower bound: M_{c'}(c) = eps * prior[c] * <p_c', p_c>, L1-normalized
    m_raw = epsilon * prior[None, :] * g_x
    m_cc = m_raw / jnp.maximum(jnp.sum(jnp.abs(m_raw), axis=-1, keepdims=True),
                               1e-30)
    # cdist(p=2) via the Gram trick on the MXU (no dedicated tiny kernel).
    sq = jnp.sum(m_cc * m_cc, axis=-1)
    dist2 = sq[:, None] + sq[None, :] - 2.0 * jnp.dot(m_cc, m_cc.T)
    lb_ccns = (jnp.sqrt(jnp.maximum(dist2, 0.0))
               * (1.0 - jnp.eye(C, dtype=jnp.float32)))

    # Vectorized extraction of the (c_prime, c) upper-triangle pairs.
    rows, cols = np.triu_indices(C, k=1)     # rows = c_prime, cols = c (static)
    sed_x_v = sed_x_mat[cols, rows]
    sed_h_v = sed_h_mat[cols, rows]
    return sed_h_v - sed_x_v, sed_h_v, sed_x_v, lb_ccns, m_cc


# ---------------------------------------------------------------------------
# Module-like wrapper reproducing ClassSeparator.__init__ / get_parameters /
# forward (diagonal covariance only).
# ---------------------------------------------------------------------------
class ClassSeparatorPallas:
    def __init__(self, num_classes, num_mixtures, num_features,
                 use_full_covariance, key):
        if use_full_covariance:
            raise NotImplementedError(
                "Full-covariance (SED_full) path not implemented")  # TODO(synk)
        self.C, self.M, self.D = num_classes, num_mixtures, num_features
        self.use_full_covariance = use_full_covariance
        k1, k2, k3, k4 = jax.random.split(key, 4)
        self.k = jnp.ones((1,), jnp.float32)
        self.epsilon = jnp.ones((1,), jnp.float32)
        self.sigma = jnp.ones((1,), jnp.float32)
        prior = jax.random.uniform(k1, (self.C,), jnp.float32)
        self.prior = prior / jnp.sum(prior)
        w = jax.random.uniform(k2, (self.C, self.M), jnp.float32)
        self.weights = w / jnp.sum(w, axis=1, keepdims=True)
        self.mean = jax.random.uniform(k3, (self.C, self.M, self.D),
                                       jnp.float32) * 100.0
        self.std = jax.random.uniform(k4, (self.C, self.M, self.D),
                                      jnp.float32) * 100.0

    def get_parameters(self):
        epsilon = jnp.abs(self.epsilon)
        prior = jnp.abs(self.prior)
        prior = prior / jnp.maximum(jnp.sum(prior, axis=-1, keepdims=True), 1e-12)
        weights = jnp.abs(self.weights)
        weights = weights / jnp.maximum(
            jnp.sum(weights, axis=-1, keepdims=True), 1e-12)
        mean = self.mean
        std = jnp.abs(self.std) + STD_MIN
        return prior, weights, mean, std, epsilon

    def forward(self):
        sed_diff, sed_h, sed_x, lb_ccns, m_cc = _forward_arrays(
            self.k, self.epsilon, self.sigma, self.prior, self.weights,
            self.mean, self.std, C=self.C, M=self.M, D=self.D)
        # Build the Python tuple list from ONE host transfer (no per-pair
        # device gathers / syncs).
        rows, cols = np.triu_indices(self.C, k=1)        # rows=c_prime, cols=c
        sed_diff_h, sed_h_h, sed_x_h = jax.device_get((sed_diff, sed_h, sed_x))
        sed_tuples = [
            (float(sed_diff_h[p]), int(rows[p]), int(cols[p]),
             float(sed_h_h[p]), float(sed_x_h[p]))
            for p in range(rows.shape[0])
        ]
        return sed_tuples, lb_ccns, m_cc


if __name__ == "__main__":
    key = jax.random.PRNGKey(0)
    model = ClassSeparatorPallas(num_classes=4, num_mixtures=3, num_features=8,
                                 use_full_covariance=False, key=key)
    sed_tuples, lb_ccns, m_cc = model.forward()
    jax.block_until_ready((lb_ccns, m_cc))
    assert len(sed_tuples) == (model.C * (model.C - 1)) // 2
    assert all(np.isfinite(t[0]) for t in sed_tuples)
    assert bool(jnp.all(jnp.isfinite(lb_ccns))) and bool(jnp.all(jnp.isfinite(m_cc)))
    print("KERNEL_OK")
</pallas_src>

<mosaic_0001>
module attributes {stable_mosaic.version = 11 : i64} {
  func.func @_fused_overlap_kernel(%arg0: i32, %arg1: i32, %arg2: i32, %arg3: memref<8x128xf32, #tpu.memory_space<vmem>>, %arg4: memref<16x128xf32, #tpu.memory_space<vmem>>, %arg5: memref<8x128xf32, #tpu.memory_space<vmem>>, %arg6: memref<16x128xf32, #tpu.memory_space<vmem>>, %arg7: memref<8x128xf32, #tpu.memory_space<vmem>>, %arg8: memref<16x128xf32, #tpu.memory_space<vmem>>, %arg9: memref<8x8xf32, #tpu.memory_space<vmem>>, %arg10: memref<16x8xf32, #tpu.memory_space<vmem>>, %arg11: memref<1x8x8xf32, #tpu.memory_space<vmem>>, %arg12: memref<1x8x8xf32, #tpu.memory_space<vmem>>, %arg13: memref<8x16xf32, #tpu.memory_space<vmem>>, %arg14: memref<8x16xf32, #tpu.memory_space<vmem>>) attributes {dimension_semantics = [#tpu.dimension_semantics<parallel>, #tpu.dimension_semantics<arbitrary>, #tpu.dimension_semantics<arbitrary>], iteration_bounds = array<i64: 2, 1, 1>, scalar_prefetch = 0 : i64, scratch_operands = 2 : i64, tpu.core_type = #tpu.core_type<tc>, window_params = [{transform_indices = @transform_0, window_bounds = array<i64: 8, 128>}, {transform_indices = @transform_1, window_bounds = array<i64: 16, 128>}, {transform_indices = @transform_2, window_bounds = array<i64: 8, 128>}, {transform_indices = @transform_3, window_bounds = array<i64: 16, 128>}, {transform_indices = @transform_4, window_bounds = array<i64: 8, 128>}, {transform_indices = @transform_5, window_bounds = array<i64: 16, 128>}, {transform_indices = @transform_6, window_bounds = array<i64: 8, 8>}, {transform_indices = @transform_7, window_bounds = array<i64: 16, 8>}, {transform_indices = @transform_8, window_bounds = array<i64: 1, 8, 8>}, {transform_indices = @transform_9, window_bounds = array<i64: 1, 8, 8>}]} {
    %c0_i32 = arith.constant 0 : i32
    %0 = arith.cmpi eq, %arg1, %c0_i32 : i32
    %c0_i32_0 = arith.constant 0 : i32
    %1 = arith.cmpi eq, %arg2, %c0_i32_0 : i32
    %2 = arith.andi %0, %1 : i1
    %3 = arith.extui %2 : i1 to i32
    %c0_i32_1 = arith.constant 0 : i32
    %4 = arith.cmpi ne, %3, %c0_i32_1 : i32
    scf.if %4 {
      %cst_27 = arith.constant 0.000000e+00 : f32
      %94 = vector.broadcast %cst_27 : f32 to vector<8x8xf32>
      %c0_28 = arith.constant 0 : index
      %c0_29 = arith.constant 0 : index
      %c0_30 = arith.constant 0 : index
      %95 = vector.load %arg11[%c0_28, %c0_29, %c0_30] : memref<1x8x8xf32, #tpu.memory_space<vmem>>, vector<1x8x8xf32>
      %96 = vector.shape_cast %95 : vector<1x8x8xf32> to vector<8x8xf32>
      %97 = vector.shape_cast %94 : vector<8x8xf32> to vector<1x8x8xf32>
      tpu.vector_store %arg11[%c0_28, %c0_29, %c0_30], %97 {strides = array<i32>} : memref<1x8x8xf32, #tpu.memory_space<vmem>>, vector<1x8x8xf32>,
      %cst_31 = arith.constant 0.000000e+00 : f32
      %98 = vector.broadcast %cst_31 : f32 to vector<8x8xf32>
      %c0_32 = arith.constant 0 : index
      %c0_33 = arith.constant 0 : index
      %c0_34 = arith.constant 0 : index
      %99 = vector.load %arg12[%c0_32, %c0_33, %c0_34] : memref<1x8x8xf32, #tpu.memory_space<vmem>>, vector<1x8x8xf32>
      %100 = vector.shape_cast %99 : vector<1x8x8xf32> to vector<8x8xf32>
      %101 = vector.shape_cast %98 : vector<8x8xf32> to vector<1x8x8xf32>
      tpu.vector_store %arg12[%c0_32, %c0_33, %c0_34], %101 {strides = array<i32>} : memref<1x8x8xf32, #tpu.memory_space<vmem>>, vector<1x8x8xf32>,
    } else {
    }
    %c0_i32_2 = arith.constant 0 : i32
    %5 = arith.cmpi eq, %arg2, %c0_i32_2 : i32
    %6 = arith.extui %5 : i1 to i32
    %c0_i32_3 = arith.constant 0 : i32
    %7 = arith.cmpi ne, %6, %c0_i32_3 : i32
    scf.if %7 {
      %cst_27 = arith.constant 0.000000e+00 : f32
      %94 = vector.broadcast %cst_27 : f32 to vector<8x16xf32>
      %c0_28 = arith.constant 0 : index
      %c0_29 = arith.constant 0 : index
      %95 = vector.load %arg13[%c0_28, %c0_29] : memref<8x16xf32, #tpu.memory_space<vmem>>, vector<8x16xf32>
      tpu.vector_store %arg13[%c0_28, %c0_29], %94 {strides = array<i32>} : memref<8x16xf32, #tpu.memory_space<vmem>>, vector<8x16xf32>,
      %cst_30 = arith.constant 0.000000e+00 : f32
      %96 = vector.broadcast %cst_30 : f32 to vector<8x16xf32>
      %c0_31 = arith.constant 0 : index
      %c0_32 = arith.constant 0 : index
      %97 = vector.load %arg14[%c0_31, %c0_32] : memref<8x16xf32, #tpu.memory_space<vmem>>, vector<8x16xf32>
      tpu.vector_store %arg14[%c0_31, %c0_32], %96 {strides = array<i32>} : memref<8x16xf32, #tpu.memory_space<vmem>>, vector<8x16xf32>,
    } else {
    }
    %c128_i32 = arith.constant 128 : i32
    %8 = arith.muli %arg2, %c128_i32 : i32
    %9 = tpu.assume_multiple %8, 128 : i32
    %c0 = arith.constant 0 : index
    %10 = arith.index_cast %9 : i32 to index
    %11 = vector.load %arg3[%c0, %10] : memref<8x128xf32, #tpu.memory_space<vmem>>, vector<8x128xf32>
    %c0_4 = arith.constant 0 : index
    %12 = arith.index_cast %9 : i32 to index
    %13 = vector.load %arg5[%c0_4, %12] : memref<8x128xf32, #tpu.memory_space<vmem>>, vector<8x128xf32>
    %c0_5 = arith.constant 0 : index
    %14 = arith.index_cast %9 : i32 to index
    %15 = vector.load %arg7[%c0_5, %14] : memref<8x128xf32, #tpu.memory_space<vmem>>, vector<8x128xf32>
    %c0_6 = arith.constant 0 : index
    %c0_7 = arith.constant 0 : index
    %16 = vector.load %arg4[%c0_6, %c0_7] : memref<16x128xf32, #tpu.memory_space<vmem>>, vector<16x128xf32>
    %17 = vector.shape_cast %11 : vector<8x128xf32> to vector<8x1x128xf32>
    %18 = vector.shape_cast %16 : vector<16x128xf32> to vector<1x16x128xf32>
    %19 = vector.broadcast %17 : vector<8x1x128xf32> to vector<8x16x128xf32>
    %20 = vector.broadcast %18 : vector<1x16x128xf32> to vector<8x16x128xf32>
    %21 = arith.subf %19, %20 : vector<8x16x128xf32>
    %22 = arith.mulf %21, %21 : vector<8x16x128xf32>
    %23 = vector.shape_cast %13 : vector<8x128xf32> to vector<8x1x128xf32>
    %c0_8 = arith.constant 0 : index
    %c0_9 = arith.constant 0 : index
    %24 = vector.load %arg6[%c0_8, %c0_9] : memref<16x128xf32, #tpu.memory_space<vmem>>, vector<16x128xf32>
    %25 = vector.shape_cast %24 : vector<16x128xf32> to vector<1x16x128xf32>
    %26 = vector.broadcast %23 : vector<8x1x128xf32> to vector<8x16x128xf32>
    %27 = vector.broadcast %25 : vector<1x16x128xf32> to vector<8x16x128xf32>
    %28 = arith.addf %26, %27 : vector<8x16x128xf32>
    %c0_10 = arith.constant 0 : index
    %c0_11 = arith.constant 0 : index
    %29 = vector.load %arg13[%c0_10, %c0_11] : memref<8x16xf32, #tpu.memory_space<vmem>>, vector<8x16xf32>
    %30 = tpu.reciprocal %28 {approx = true} : vector<8x16x128xf32> -> vector<8x16x128xf32>
    %31 = arith.mulf %28, %30 : vector<8x16x128xf32>
    %cst = arith.constant 2.000000e+00 : f32
    %32 = vector.broadcast %cst : f32 to vector<8x16x128xf32>
    %33 = arith.subf %32, %31 : vector<8x16x128xf32>
    %34 = arith.mulf %30, %33 : vector<8x16x128xf32>
    %35 = arith.mulf %22, %34 : vector<8x16x128xf32>
    %cst_12 = arith.constant dense<0.000000e+00> : vector<8x16xf32>
    %36 = vector.multi_reduction <add>, %35, %cst_12 [2] : vector<8x16x128xf32> to vector<8x16xf32>
    %37 = vector.extract_strided_slice %28 {offsets = [0, 0, 0], sizes = [8, 16, 16], strides = [1, 1, 1]} : vector<8x16x128xf32> to vector<8x16x16xf32>
    %38 = vector.extract_strided_slice %28 {offsets = [0, 0, 16], sizes = [8, 16, 16], strides = [1, 1, 1]} : vector<8x16x128xf32> to vector<8x16x16xf32>
    %39 = arith.mulf %37, %38 : vector<8x16x16xf32>
    %40 = vector.extract_strided_slice %28 {offsets = [0, 0, 32], sizes = [8, 16, 16], strides = [1, 1, 1]} : vector<8x16x128xf32> to vector<8x16x16xf32>
    %41 = arith.mulf %39, %40 : vector<8x16x16xf32>
    %42 = vector.extract_strided_slice %28 {offsets = [0, 0, 48], sizes = [8, 16, 16], strides = [1, 1, 1]} : vector<8x16x128xf32> to vector<8x16x16xf32>
    %43 = arith.mulf %41, %42 : vector<8x16x16xf32>
    %44 = vector.extract_strided_slice %28 {offsets = [0, 0, 64], sizes = [8, 16, 16], strides = [1, 1, 1]} : vector<8x16x128xf32> to vector<8x16x16xf32>
    %45 = arith.mulf %43, %44 : vector<8x16x16xf32>
    %46 = vector.extract_strided_slice %28 {offsets = [0, 0, 80], sizes = [8, 16, 16], strides = [1, 1, 1]} : vector<8x16x128xf32> to vector<8x16x16xf32>
    %47 = arith.mulf %45, %46 : vector<8x16x16xf32>
    %48 = vector.extract_strided_slice %28 {offsets = [0, 0, 96], sizes = [8, 16, 16], strides = [1, 1, 1]} : vector<8x16x128xf32> to vector<8x16x16xf32>
    %49 = arith.mulf %47, %48 : vector<8x16x16xf32>
    %50 = vector.extract_strided_slice %28 {offsets = [0, 0, 112], sizes = [8, 16, 16], strides = [1, 1, 1]} : vector<8x16x128xf32> to vector<8x16x16xf32>
    %51 = arith.mulf %49, %50 : vector<8x16x16xf32>
    %52 = math.log %51 : vector<8x16x16xf32>
    %cst_13 = arith.constant dense<0.000000e+00> : vector<8x16xf32>
    %53 = vector.multi_reduction <add>, %52, %cst_13 [2] : vector<8x16x16xf32> to vector<8x16xf32>
    %54 = arith.addf %36, %53 : vector<8x16xf32>
    %55 = arith.addf %29, %54 : vector<8x16xf32>
    %c0_14 = arith.constant 0 : index
    %c0_15 = arith.constant 0 : index
    %56 = vector.load %arg13[%c0_14, %c0_15] : memref<8x16xf32, #tpu.memory_space<vmem>>, vector<8x16xf32>
    tpu.vector_store %arg13[%c0_14, %c0_15], %55 {strides = array<i32>} : memref<8x16xf32, #tpu.memory_space<vmem>>, vector<8x16xf32>,
    %57 = vector.shape_cast %15 : vector<8x128xf32> to vector<8x1x128xf32>
    %c0_16 = arith.constant 0 : index
    %c0_17 = arith.constant 0 : index
    %58 = vector.load %arg8[%c0_16, %c0_17] : memref<16x128xf32, #tpu.memory_space<vmem>>, vector<16x128xf32>
    %59 = vector.shape_cast %58 : vector<16x128xf32> to vector<1x16x128xf32>
    %60 = vector.broadcast %57 : vector<8x1x128xf32> to vector<8x16x128xf32>
    %61 = vector.broadcast %59 : vector<1x16x128xf32> to vector<8x16x128xf32>
    %62 = arith.addf %60, %61 : vector<8x16x128xf32>
    %c0_18 = arith.constant 0 : index
    %c0_19 = arith.constant 0 : index
    %63 = vector.load %arg14[%c0_18, %c0_19] : memref<8x16xf32, #tpu.memory_space<vmem>>, vector<8x16xf32>
    %64 = tpu.reciprocal %62 {approx = true} : vector<8x16x128xf32> -> vector<8x16x128xf32>
    %65 = arith.mulf %62, %64 : vector<8x16x128xf32>
    %cst_20 = arith.constant 2.000000e+00 : f32
    %66 = vector.broadcast %cst_20 : f32 to vector<8x16x128xf32>
    %67 = arith.subf %66, %65 : vector<8x16x128xf32>
    %68 = arith.mulf %64, %67 : vector<8x16x128xf32>
    %69 = arith.mulf %22, %68 : vector<8x16x128xf32>
    %cst_21 = arith.constant dense<0.000000e+00> : vector<8x16xf32>
    %70 = vector.multi_reduction <add>, %69, %cst_21 [2] : vector<8x16x128xf32> to vector<8x16xf32>
    %71 = vector.extract_strided_slice %62 {offsets = [0, 0, 0], sizes = [8, 16, 16], strides = [1, 1, 1]} : vector<8x16x128xf32> to vector<8x16x16xf32>
    %72 = vector.extract_strided_slice %62 {offsets = [0, 0, 16], sizes = [8, 16, 16], strides = [1, 1, 1]} : vector<8x16x128xf32> to vector<8x16x16xf32>
    %73 = arith.mulf %71, %72 : vector<8x16x16xf32>
    %74 = vector.extract_strided_slice %62 {offsets = [0, 0, 32], sizes = [8, 16, 16], strides = [1, 1, 1]} : vector<8x16x128xf32> to vector<8x16x16xf32>
    %75 = arith.mulf %73, %74 : vector<8x16x16xf32>
    %76 = vector.extract_strided_slice %62 {offsets = [0, 0, 48], sizes = [8, 16, 16], strides = [1, 1, 1]} : vector<8x16x128xf32> to vector<8x16x16xf32>
    %77 = arith.mulf %75, %76 : vector<8x16x16xf32>
    %78 = vector.extract_strided_slice %62 {offsets = [0, 0, 64], sizes = [8, 16, 16], strides = [1, 1, 1]} : vector<8x16x128xf32> to vector<8x16x16xf32>
    %79 = arith.mulf %77, %78 : vector<8x16x16xf32>
    %80 = vector.extract_strided_slice %62 {offsets = [0, 0, 80], sizes = [8, 16, 16], strides = [1, 1, 1]} : vector<8x16x128xf32> to vector<8x16x16xf32>
    %81 = arith.mulf %79, %80 : vector<8x16x16xf32>
    %82 = vector.extract_strided_slice %62 {offsets = [0, 0, 96], sizes = [8, 16, 16], strides = [1, 1, 1]} : vector<8x16x128xf32> to vector<8x16x16xf32>
    %83 = arith.mulf %81, %82 : vector<8x16x16xf32>
    %84 = vector.extract_strided_slice %62 {offsets = [0, 0, 112], sizes = [8, 16, 16], strides = [1, 1, 1]} : vector<8x16x128xf32> to vector<8x16x16xf32>
    %85 = arith.mulf %83, %84 : vector<8x16x16xf32>
    %86 = math.log %85 : vector<8x16x16xf32>
    %cst_22 = arith.constant dense<0.000000e+00> : vector<8x16xf32>
    %87 = vector.multi_reduction <add>, %86, %cst_22 [2] : vector<8x16x16xf32> to vector<8x16xf32>
    %88 = arith.addf %70, %87 : vector<8x16xf32>
    %89 = arith.addf %63, %88 : vector<8x16xf32>
    %c0_23 = arith.constant 0 : index
    %c0_24 = arith.constant 0 : index
    %90 = vector.load %arg14[%c0_23, %c0_24] : memref<8x16xf32, #tpu.memory_space<vmem>>, vector<8x16xf32>
    tpu.vector_store %arg14[%c0_23, %c0_24], %89 {strides = array<i32>} : memref<8x16xf32, #tpu.memory_space<vmem>>, vector<8x16xf32>,
    %c0_i32_25 = arith.constant 0 : i32
    %91 = arith.cmpi eq, %arg2, %c0_i32_25 : i32
    %92 = arith.extui %91 : i1 to i32
    %c0_i32_26 = arith.constant 0 : i32
    %93 = arith.cmpi ne, %92, %c0_i32_26 : i32
    scf.if %93 {
      %c0_27 = arith.constant 0 : index
      %c0_28 = arith.constant 0 : index
      %94 = vector.load %arg13[%c0_27, %c0_28] : memref<8x16xf32, #tpu.memory_space<vmem>>, vector<8x16xf32>
      %cst_29 = arith.constant -5.000000e-01 : f32
      %95 = vector.broadcast %cst_29 : f32 to vector<8x16xf32>
      %96 = arith.mulf %95, %94 : vector<8x16xf32>
      %cst_30 = arith.constant -7.35150814 : f32
      %97 = vector.broadcast %cst_30 : f32 to vector<8x16xf32>
      %98 = arith.addf %96, %97 : vector<8x16xf32>
      %99 = math.exp %98 : vector<8x16xf32>
      %c0_31 = arith.constant 0 : index
      %c0_32 = arith.constant 0 : index
      %100 = vector.load %arg14[%c0_31, %c0_32] : memref<8x16xf32, #tpu.memory_space<vmem>>, vector<8x16xf32>
      %cst_33 = arith.constant -5.000000e-01 : f32
      %101 = vector.broadcast %cst_33 : f32 to vector<8x16xf32>
      %102 = arith.mulf %101, %100 : vector<8x16xf32>
      %cst_34 = arith.constant -7.35150814 : f32
      %103 = vector.broadcast %cst_34 : f32 to vector<8x16xf32>
      %104 = arith.addf %102, %103 : vector<8x16xf32>
      %105 = math.exp %104 : vector<8x16xf32>
      %c0_35 = arith.constant 0 : index
      %c0_36 = arith.constant 0 : index
      %106 = vector.load %arg9[%c0_35, %c0_36] : memref<8x8xf32, #tpu.memory_space<vmem>>, vector<8x8xf32>
      %c0_37 = arith.constant 0 : index
      %c0_38 = arith.constant 0 : index
      %107 = vector.load %arg10[%c0_37, %c0_38] : memref<16x8xf32, #tpu.memory_space<vmem>>, vector<16x8xf32>
      %108 = tpu.concatenate %99, %105 in 1 : vector<8x16xf32>, vector<8x16xf32> -> vector<8x32xf32>
      %cst_39 = arith.constant dense<0.000000e+00> : vector<8x32xf32>
      %109 = tpu.matmul %106, %108, %cst_39 {dimension_numbers = #tpu.dot_dimension_numbers<[0], [0], [1], [1], [0, 1, 1, 1], [], []>} : vector<8x8xf32>, vector<8x32xf32>, vector<8x32xf32> -> vector<8x32xf32>
      %c0_40 = arith.constant 0 : index
      %c0_41 = arith.constant 0 : index
      %c0_42 = arith.constant 0 : index
      %110 = vector.load %arg11[%c0_40, %c0_41, %c0_42] : memref<1x8x8xf32, #tpu.memory_space<vmem>>, vector<1x8x8xf32>
      %111 = vector.shape_cast %110 : vector<1x8x8xf32> to vector<8x8xf32>
      %112 = vector.extract_strided_slice %109 {offsets = [0, 0], sizes = [8, 16], strides = [1, 1]} : vector<8x32xf32> to vector<8x16xf32>
      %cst_43 = arith.constant dense<0.000000e+00> : vector<8x8xf32>
      %113 = tpu.matmul %112, %107, %cst_43 {dimension_numbers = #tpu.dot_dimension_numbers<[1], [0], [0], [1], [0, 0, 1, 1], [], []>} : vector<8x16xf32>, vector<16x8xf32>, vector<8x8xf32> -> vector<8x8xf32>
      %114 = arith.addf %111, %113 : vector<8x8xf32>
      %c0_44 = arith.constant 0 : index
      %c0_45 = arith.constant 0 : index
      %c0_46 = arith.constant 0 : index
      %115 = vector.load %arg11[%c0_44, %c0_45, %c0_46] : memref<1x8x8xf32, #tpu.memory_space<vmem>>, vector<1x8x8xf32>
      %116 = vector.shape_cast %115 : vector<1x8x8xf32> to vector<8x8xf32>
      %117 = vector.shape_cast %114 : vector<8x8xf32> to vector<1x8x8xf32>
      tpu.vector_store %arg11[%c0_44, %c0_45, %c0_46], %117 {strides = array<i32>} : memref<1x8x8xf32, #tpu.memory_space<vmem>>, vector<1x8x8xf32>,
      %c0_47 = arith.constant 0 : index
      %c0_48 = arith.constant 0 : index
      %c0_49 = arith.constant 0 : index
      %118 = vector.load %arg12[%c0_47, %c0_48, %c0_49] : memref<1x8x8xf32, #tpu.memory_space<vmem>>, vector<1x8x8xf32>
      %119 = vector.shape_cast %118 : vector<1x8x8xf32> to vector<8x8xf32>
      %120 = vector.extract_strided_slice %109 {offsets = [0, 16], sizes = [8, 16], strides = [1, 1]} : vector<8x32xf32> to vector<8x16xf32>
      %cst_50 = arith.constant dense<0.000000e+00> : vector<8x8xf32>
      %121 = tpu.matmul %120, %107, %cst_50 {dimension_numbers = #tpu.dot_dimension_numbers<[1], [0], [0], [1], [0, 0, 1, 1], [], []>} : vector<8x16xf32>, vector<16x8xf32>, vector<8x8xf32> -> vector<8x8xf32>
      %122 = arith.addf %119, %121 : vector<8x8xf32>
      %c0_51 = arith.constant 0 : index
      %c0_52 = arith.constant 0 : index
      %c0_53 = arith.constant 0 : index
      %123 = vector.load %arg12[%c0_51, %c0_52, %c0_53] : memref<1x8x8xf32, #tpu.memory_space<vmem>>, vector<1x8x8xf32>
      %124 = vector.shape_cast %123 : vector<1x8x8xf32> to vector<8x8xf32>
      %125 = vector.shape_cast %122 : vector<8x8xf32> to vector<1x8x8xf32>
      tpu.vector_store %arg12[%c0_51, %c0_52, %c0_53], %125 {strides = array<i32>} : memref<1x8x8xf32, #tpu.memory_space<vmem>>, vector<1x8x8xf32>,
    } else {
    }
    return
  }
  func.func @transform_0(%arg0: i32, %arg1: i32, %arg2: i32) -> (i32, i32) {
    %c0_i32 = arith.constant 0 : i32
    %c0_i32_0 = arith.constant 0 : i32
    return %arg0, %c0_i32 : i32, i32
  }
  func.func @transform_1(%arg0: i32, %arg1: i32, %arg2: i32) -> (i32, i32) {
    %c0_i32 = arith.constant 0 : i32
    return %arg1, %arg2 : i32, i32
  }
  func.func @transform_2(%arg0: i32, %arg1: i32, %arg2: i32) -> (i32, i32) {
    %c0_i32 = arith.constant 0 : i32
    %c0_i32_0 = arith.constant 0 : i32
    return %arg0, %c0_i32 : i32, i32
  }
  func.func @transform_3(%arg0: i32, %arg1: i32, %arg2: i32) -> (i32, i32) {
    %c0_i32 = arith.constant 0 : i32
    return %arg1, %arg2 : i32, i32
  }
  func.func @transform_4(%arg0: i32, %arg1: i32, %arg2: i32) -> (i32, i32) {
    %c0_i32 = arith.constant 0 : i32
    %c0_i32_0 = arith.constant 0 : i32
    return %arg0, %c0_i32 : i32, i32
  }
  func.func @transform_5(%arg0: i32, %arg1: i32, %arg2: i32) -> (i32, i32) {
    %c0_i32 = arith.constant 0 : i32
    return %arg1, %arg2 : i32, i32
  }
  func.func @transform_6(%arg0: i32, %arg1: i32, %arg2: i32) -> (i32, i32) {
    %c0_i32 = arith.constant 0 : i32
    %c0_i32_0 = arith.constant 0 : i32
    return %arg0, %c0_i32 : i32, i32
  }
  func.func @transform_7(%arg0: i32, %arg1: i32, %arg2: i32) -> (i32, i32) {
    %c0_i32 = arith.constant 0 : i32
    %c0_i32_0 = arith.constant 0 : i32
    return %arg1, %c0_i32 : i32, i32
  }
  func.func @transform_8(%arg0: i32, %arg1: i32, %arg2: i32) -> (i32, i32, i32) {
    %c0_i32 = arith.constant 0 : i32
    %c0_i32_0 = arith.constant 0 : i32
    %c0_i32_1 = arith.constant 0 : i32
    return %arg0, %c0_i32, %c0_i32_0 : i32, i32, i32
  }
  func.func @transform_9(%arg0: i32, %arg1: i32, %arg2: i32) -> (i32, i32, i32) {
    %c0_i32 = arith.constant 0 : i32
    %c0_i32_0 = arith.constant 0 : i32
    %c0_i32_1 = arith.constant 0 : i32
    return %arg0, %c0_i32, %c0_i32_0 : i32, i32, i32
  }
}

</mosaic_0001>

<llo_original>
// kernel: mul.32
$region0: #{mul.32}
  %s0 = inlined_call_operand.vmem [shape: f32[4,3], index: 0, kind: input, shape index: {}]
  %s1 = inlined_call_operand.vmem [shape: f32[12], index: 1, kind: output, shape index: {}]
  $region1: #{mul.32} parent=0
    #allocation0 [shape = 'u8[4096]{0}', space=vmem, size = 0x1000, scoped, tag = 'scoped mem for output reshape']
    #allocation1 [shape = 'u8[4096]{0}', space=vmem, size = 0x1000, scoped, tag = 'scoped mem for input reshape']
    %s3 = sshll.u32 1, 4
    %s4 = ssub.s32 %s3, 1
    %v5 = vld [vmem:[%s0] sm:%s4]
    %6 = vst [vmem:[#allocation1] sm:%s4] %v5
    %v7 = vld [vmem:[#allocation1] sm:$0x1]
    %vm8 = vcmask 23552
    %9 = vst.msk [vmem:[#allocation0] sm:$0x1] %vm8, %v7
    %s10 = scalar_lea.vmem [#allocation1], 3
    %v11 = vld [vmem:[%s10] sm:$0x1]
    %12 = vrot.lane.b32.xlu0 %v11, 9
    %v13 = vpop.permute.xlu0 %12
    %vm14 = vcmask 97352
    %15 = vst.msk [vmem:[#allocation0] sm:$0x1] %vm14, %v13
    %s16 = scalar_lea.vmem [#allocation1], 2
    %v17 = vld [vmem:[%s16] sm:$0x1]
    %18 = vrot.lane.b32.xlu0 %v17, 6
    %v19 = vpop.permute.xlu0 %18
    %vm20 = vcmask 72752
    %21 = vst.msk [vmem:[#allocation0] sm:$0x1] %vm20, %v19
    %s22 = scalar_lea.vmem [#allocation1], 1
    %v23 = vld [vmem:[%s22] sm:$0x1]
    %24 = vrot.lane.b32.xlu0 %v23, 3
    %v25 = vpop.permute.xlu0 %24
    %vm26 = vcmask 48152
    %27 = vst.msk [vmem:[#allocation0] sm:$0x1] %vm26, %v25
    %s29 = sshll.u32 1, 1
    %s30 = ssub.s32 %s29, 1
    %v32 = vld [vmem:[#allocation0] sm:%s30]
    %s33 = sshll.u32 1, 1
    %s34 = ssub.s32 %s33, 1
    %35 = vst [vmem:[%s1] sm:%s34] %v32

// kernel: sub.9
$region0: #{sub.9}
  #allocation2 [shape = 's32[1]{0}', space=sflag, size = 0x4, scoped, tag = 'scoped memory for sub.9']
  %s0 = inlined_call_operand.vmem [shape: f32[6], index: 0, kind: input, shape index: {}]
  %s1 = inlined_call_operand.vmem [shape: f32[6], index: 1, kind: input, shape index: {}]
  %s2 = inlined_call_operand.hbm [shape: f32[6], index: 2, kind: output, shape index: {}]
  $region1: #{sub.9} parent=0
    #allocation0 [shape = 'u8[512]{0}', space=vmem, size = 0x400, scoped, tag = 'operand span for operand 2']
    #allocation1 [shape = 's32[1]{0}', space=sflag, size = 0x4, scoped, tag = 'scoped memory for sub.9']
    %3 = vsyncpa [#allocation1], 0
    %v4 = vld [vmem:[%s0] sm:$0x1]
    %v5 = vld [vmem:[%s1] sm:$0x1]
    %6 = xla_tuple %v4, %v5
    %7 = xla_tuple %6
    %v8 = vsub.f32 %v4, %v5
    %9 = xla_tuple %v8
    %10 = vst [vmem:[#allocation0] sm:$0x1] %v8
    %s12 = ssub.s32 16, 16
    %13 = vsyncadd [#allocation1], %s12
    %s15 = sshll.u32 [#allocation0], 4
    %s16 = int_to_ptr.vmem [resolvable:$true] %s15
    %18 = dma.vmem_to_hbm [thread:$0]  %s16, 16, %s2, [#allocation1]
    %19 = dma.done [#allocation1], 16
    %20 = vsyncpa [#allocation1], 1

// kernel: _forward_arrays.1
$region0: #{_forward_arrays.1}
  #allocation0 [shape = 'u32[]', space=smem, size = 0x4, offset = 0x4, fixed_abs, tag = 'smem constant byte address 0x4 - core index']
  #allocation1 [shape = 'u32[144,128]{1,0:T(1,128)}', space=vmem, size = 0x12000, scoped, tag = 'internal scratch']
  #allocation2 [shape = 'f32[8,16]{1,0:T(8,128)}', space=vmem, size = 0x1000, scoped, tag = 'scratch operand']
  #allocation3 [shape = 'f32[8,16]{1,0:T(8,128)}', space=vmem, size = 0x1000, scoped, tag = 'scratch operand']
  %s0 = inlined_call_operand.vmem [shape: f32[16,128], index: 0, kind: input, shape index: {}, may-alias: {0,1}]
  %s1 = inlined_call_operand.vmem [shape: f32[16,128], index: 1, kind: input, shape index: {}, may-alias: {0,1}]
  %s2 = inlined_call_operand.vmem [shape: f32[16,128], index: 2, kind: input, shape index: {}, may-alias: {2,3}]
  %s3 = inlined_call_operand.vmem [shape: f32[16,128], index: 3, kind: input, shape index: {}, may-alias: {2,3}]
  %s4 = inlined_call_operand.vmem [shape: f32[16,128], index: 4, kind: input, shape index: {}, may-alias: {4,5}]
  %s5 = inlined_call_operand.vmem [shape: f32[16,128], index: 5, kind: input, shape index: {}, may-alias: {4,5}]
  %s6 = inlined_call_operand.vmem [shape: f32[16,8], index: 6, kind: input, shape index: {}, may-alias: {6,7}]
  %s7 = inlined_call_operand.vmem [shape: f32[16,8], index: 7, kind: input, shape index: {}, may-alias: {6,7}]
  %s8 = inlined_call_operand.vmem [shape: f32[2,8,8], index: 8, kind: output, shape index: {0}]
  %s9 = inlined_call_operand.vmem [shape: f32[2,8,8], index: 9, kind: output, shape index: {1}]
  %10 = xla_tuple %s8, %s9
  %s11 = sld [smem:[#allocation0]]
  $region85: #{_forward_arrays.1} parent=0
    _
  %s13 = ssub.s32 1, %s11
  %s14 = scalar_select 0, %s13, %s11
  loop: start=0, step=1, limit=4
  $region2: #{_forward_arrays.1} parent=0 // loop_pre_header
    _
  $region3: #{_forward_arrays.1} parent=0 // loop_header
    %s16 = sphi 0, %s20
    %p17 = scmp.ge.s32.totalorder %s16, 4
    %s23 = sphi 0, %s42
    %s24 = sphi 0, %s38
    %s25 = sphi 0, %s34
    %s26 = sphi 0, %s23
    %s27 = sphi 0, %s24
    %s28 = sphi 0, %s25
    %s29 = sphi 0, %s26
    %s30 = sphi 0, %s27
    %s31 = sphi 0, %s28
    %s45 = sphi 0, %s47
    %s48 = sphi 0, %s45
    %s49 = sphi 0, %s48
    %s65 = sphi 0, %s49
    %s73 = sphi 0, %s75
    %s76 = sphi 0, %s73
    %s77 = sphi 0, %s76
    %s93 = sphi 0, %s77
    %s99 = sphi 0, %s101
    %s102 = sphi 0, %s99
    %s103 = sphi 0, %s102
    %s119 = sphi 0, %s103
    %s127 = sphi 0, %s129
    %s130 = sphi 0, %s127
    %s131 = sphi 0, %s130
    %s147 = sphi 0, %s131
    %s153 = sphi 0, %s155
    %s156 = sphi 0, %s153
    %s157 = sphi 0, %s156
    %s173 = sphi 0, %s157
    %s181 = sphi 0, %s183
    %s184 = sphi 0, %s181
    %s185 = sphi 0, %s184
    %s201 = sphi 0, %s185
    %s207 = sphi 0, %s209
    %s210 = sphi 0, %s207
    %s211 = sphi 0, %s210
    %s227 = sphi 0, %s211
    %s233 = sphi 0, %s235
    %s236 = sphi 0, %s233
    %s237 = sphi 0, %s236
    %s253 = sphi 0, %s237
    %s259 = sphi 0, %s261
    %s262 = sphi 0, %s259
    %s263 = sphi 0, %s262
    %s279 = sphi 0, %s263
    %s285 = sphi 0, %s287
    %s288 = sphi 0, %s285
    %s289 = sphi 0, %s288
    %s305 = sphi 0, %s289
  $region4: #{_forward_arrays.1} parent=0 // loop_header_branch
    %19 = sbr.rel (%p17) target = $region8
  $region5: #{_forward_arrays.1} parent=0 // loop_body
    %s21 = ssub.s32 %s16, 1
    %s22 = ssub.s32 %s16, 2
    %s32 = sadd.s32 1, %s25
    %p33 = scmp.ge.s32.totalorder %s32, 1
    %s34 = scalar_select %p33, 0, %s32
    %s35 = sadd.s32 1, %s24
    %s36 = scalar_select %p33, %s35, %s24
    %p37 = scmp.ge.s32.totalorder %s36, 1
    %s38 = scalar_select %p37, 0, %s36
    %s39 = sadd.s32 1, %s23
    %s40 = scalar_select %p37, %s39, %s23
    %p41 = scmp.ge.s32.totalorder %s40, 2
    %s42 = scalar_select %p41, 0, %s40
    %s43 = ssub.s32 %s23, %s42
    %p44 = scmp.eq.s32.totalorder %s43, 0
    %s46 = sadd.s32 %s45, 1
    %s47 = scalar_select %p44, %s45, %s46
    %p50 = pneg %p44
    %p51 = scmp.eq.s32.totalorder %s16, 1
    %p52 = por %p50, %p51
    %p53 = scmp.ne.s32.totalorder %s45, %s48
    %p54 = scmp.eq.s32.totalorder %s16, 0
    %p55 = por %p53, %p54
    %p56 = scmp.ne.s32.totalorder %s45, %s48
    %p57 = scmp.eq.s32.totalorder %s21, 1
    %p58 = por %p56, %p57
    %p59 = scmp.ne.s32.totalorder %s48, %s49
    %p60 = scmp.eq.s32.totalorder %s21, 0
    %p61 = por %p59, %p60
    %p62 = scmp.ne.s32.totalorder %s48, %s49
    %p63 = scmp.eq.s32.totalorder %s22, 1
    %p64 = por %p62, %p63
    %p66 = scmp.ne.s32.totalorder %s49, %s65
    %p67 = scmp.eq.s32.totalorder %s22, 0
    %p68 = por %p66, %p67
    %s69 = ssub.s32 %s24, %s38
    %s70 = ssub.s32 %s25, %s34
    %s71 = sor.u32 %s69, %s70
    %p72 = scmp.eq.s32.totalorder %s71, 0
    %s74 = sadd.s32 %s73, 1
    %s75 = scalar_select %p72, %s73, %s74
    %p78 = pneg %p72
    %p79 = scmp.eq.s32.totalorder %s16, 1
    %p80 = por %p78, %p79
    %p81 = scmp.ne.s32.totalorder %s73, %s76
    %p82 = scmp.eq.s32.totalorder %s16, 0
    %p83 = por %p81, %p82
    %p84 = scmp.ne.s32.totalorder %s73, %s76
    %p85 = scmp.eq.s32.totalorder %s21, 1
    %p86 = por %p84, %p85
    %p87 = scmp.ne.s32.totalorder %s76, %s77
    %p88 = scmp.eq.s32.totalorder %s21, 0
    %p89 = por %p87, %p88
    %p90 = scmp.ne.s32.totalorder %s76, %s77
    %p91 = scmp.eq.s32.totalorder %s22, 1
    %p92 = por %p90, %p91
    %p94 = scmp.ne.s32.totalorder %s77, %s93
    %p95 = scmp.eq.s32.totalorder %s22, 0
    %p96 = por %p94, %p95
    %s97 = ssub.s32 %s23, %s42
    %p98 = scmp.eq.s32.totalorder %s97, 0
    %s100 = sadd.s32 %s99, 1
    %s101 = scalar_select %p98, %s99, %s100
    %p104 = pneg %p98
    %p105 = scmp.eq.s32.totalorder %s16, 1
    %p106 = por %p104, %p105
    %p107 = scmp.ne.s32.totalorder %s99, %s102
    %p108 = scmp.eq.s32.totalorder %s16, 0
    %p109 = por %p107, %p108
    %p110 = scmp.ne.s32.totalorder %s99, %s102
    %p111 = scmp.eq.s32.totalorder %s21, 1
    %p112 = por %p110, %p111
    %p113 = scmp.ne.s32.totalorder %s102, %s103
    %p114 = scmp.eq.s32.totalorder %s21, 0
    %p115 = por %p113, %p114
    %p116 = scmp.ne.s32.totalorder %s102, %s103
    %p117 = scmp.eq.s32.totalorder %s22, 1
    %p118 = por %p116, %p117
    %p120 = scmp.ne.s32.totalorder %s103, %s119
    %p121 = scmp.eq.s32.totalorder %s22, 0
    %p122 = por %p120, %p121
    %s123 = ssub.s32 %s24, %s38
    %s124 = ssub.s32 %s25, %s34
    %s125 = sor.u32 %s123, %s124
    %p126 = scmp.eq.s32.totalorder %s125, 0
    %s128 = sadd.s32 %s127, 1
    %s129 = scalar_select %p126, %s127, %s128
    %p132 = pneg %p126
    %p133 = scmp.eq.s32.totalorder %s16, 1
    %p134 = por %p132, %p133
    %p135 = scmp.ne.s32.totalorder %s127, %s130
    %p136 = scmp.eq.s32.totalorder %s16, 0
    %p137 = por %p135, %p136
    %p138 = scmp.ne.s32.totalorder %s127, %s130
    %p139 = scmp.eq.s32.totalorder %s21, 1
    %p140 = por %p138, %p139
    %p141 = scmp.ne.s32.totalorder %s130, %s131
    %p142 = scmp.eq.s32.totalorder %s21, 0
    %p143 = por %p141, %p142
    %p144 = scmp.ne.s32.totalorder %s130, %s131
    %p145 = scmp.eq.s32.totalorder %s22, 1
    %p146 = por %p144, %p145
    %p148 = scmp.ne.s32.totalorder %s131, %s147
    %p149 = scmp.eq.s32.totalorder %s22, 0
    %p150 = por %p148, %p149
    %s151 = ssub.s32 %s23, %s42
    %p152 = scmp.eq.s32.totalorder %s151, 0
    %s154 = sadd.s32 %s153, 1
    %s155 = scalar_select %p152, %s153, %s154
    %p158 = pneg %p152
    %p159 = scmp.eq.s32.totalorder %s16, 1
    %p160 = por %p158, %p159
    %p161 = scmp.ne.s32.totalorder %s153, %s156
    %p162 = scmp.eq.s32.totalorder %s16, 0
    %p163 = por %p161, %p162
    %p164 = scmp.ne.s32.totalorder %s153, %s156
    %p165 = scmp.eq.s32.totalorder %s21, 1
    %p166 = por %p164, %p165
    %p167 = scmp.ne.s32.totalorder %s156, %s157
    %p168 = scmp.eq.s32.totalorder %s21, 0
    %p169 = por %p167, %p168
    %p170 = scmp.ne.s32.totalorder %s156, %s157
    %p171 = scmp.eq.s32.totalorder %s22, 1
    %p172 = por %p170, %p171
    %p174 = scmp.ne.s32.totalorder %s157, %s173
    %p175 = scmp.eq.s32.totalorder %s22, 0
    %p176 = por %p174, %p175
    %s177 = ssub.s32 %s24, %s38
    %s178 = ssub.s32 %s25, %s34
    %s179 = sor.u32 %s177, %s178
    %p180 = scmp.eq.s32.totalorder %s179, 0
    %s182 = sadd.s32 %s181, 1
    %s183 = scalar_select %p180, %s181, %s182
    %p186 = pneg %p180
    %p187 = scmp.eq.s32.totalorder %s16, 1
    %p188 = por %p186, %p187
    %p189 = scmp.ne.s32.totalorder %s181, %s184
    %p190 = scmp.eq.s32.totalorder %s16, 0
    %p191 = por %p189, %p190
    %p192 = scmp.ne.s32.totalorder %s181, %s184
    %p193 = scmp.eq.s32.totalorder %s21, 1
    %p194 = por %p192, %p193
    %p195 = scmp.ne.s32.totalorder %s184, %s185
    %p196 = scmp.eq.s32.totalorder %s21, 0
    %p197 = por %p195, %p196
    %p198 = scmp.ne.s32.totalorder %s184, %s185
    %p199 = scmp.eq.s32.totalorder %s22, 1
    %p200 = por %p198, %p199
    %p202 = scmp.ne.s32.totalorder %s185, %s201
    %p203 = scmp.eq.s32.totalorder %s22, 0
    %p204 = por %p202, %p203
    %s205 = ssub.s32 %s23, %s42
    %p206 = scmp.eq.s32.totalorder %s205, 0
    %s208 = sadd.s32 %s207, 1
    %s209 = scalar_select %p206, %s207, %s208
    %p212 = pneg %p206
    %p213 = scmp.eq.s32.totalorder %s16, 1
    %p214 = por %p212, %p213
    %p215 = scmp.ne.s32.totalorder %s207, %s210
    %p216 = scmp.eq.s32.totalorder %s16, 0
    %p217 = por %p215, %p216
    %p218 = scmp.ne.s32.totalorder %s207, %s210
    %p219 = scmp.eq.s32.totalorder %s21, 1
    %p220 = por %p218, %p219
    %p221 = scmp.ne.s32.totalorder %s210, %s211
    %p222 = scmp.eq.s32.totalorder %s21, 0
    %p223 = por %p221, %p222
    %p224 = scmp.ne.s32.totalorder %s210, %s211
    %p225 = scmp.eq.s32.totalorder %s22, 1
    %p226 = por %p224, %p225
    %p228 = scmp.ne.s32.totalorder %s211, %s227
    %p229 = scmp.eq.s32.totalorder %s22, 0
    %p230 = por %p228, %p229
    %s231 = ssub.s32 %s24, %s38
    %p232 = scmp.eq.s32.totalorder %s231, 0
    %s234 = sadd.s32 %s233, 1
    %s235 = scalar_select %p232, %s233, %s234
    %p238 = pneg %p232
    %p239 = scmp.eq.s32.totalorder %s16, 1
    %p240 = por %p238, %p239
    %p241 = scmp.ne.s32.totalorder %s233, %s236
    %p242 = scmp.eq.s32.totalorder %s16, 0
    %p243 = por %p241, %p242
    %p244 = scmp.ne.s32.totalorder %s233, %s236
    %p245 = scmp.eq.s32.totalorder %s21, 1
    %p246 = por %p244, %p245
    %p247 = scmp.ne.s32.totalorder %s236, %s237
    %p248 = scmp.eq.s32.totalorder %s21, 0
    %p249 = por %p247, %p248
    %p250 = scmp.ne.s32.totalorder %s236, %s237
    %p251 = scmp.eq.s32.totalorder %s22, 1
    %p252 = por %p250, %p251
    %p254 = scmp.ne.s32.totalorder %s237, %s253
    %p255 = scmp.eq.s32.totalorder %s22, 0
    %p256 = por %p254, %p255
    %s257 = ssub.s32 %s23, %s42
    %p258 = scmp.eq.s32.totalorder %s257, 0
    %s260 = sadd.s32 %s259, 1
    %s261 = scalar_select %p258, %s259, %s260
    %p264 = pneg %p258
    %p265 = scmp.eq.s32.totalorder %s16, 1
    %p266 = por %p264, %p265
    %p267 = scmp.ne.s32.totalorder %s259, %s262
    %p268 = scmp.eq.s32.totalorder %s16, 0
    %p269 = por %p267, %p268
    %p270 = scmp.ne.s32.totalorder %s259, %s262
    %p271 = scmp.eq.s32.totalorder %s21, 1
    %p272 = por %p270, %p271
    %p273 = scmp.ne.s32.totalorder %s262, %s263
    %p274 = scmp.eq.s32.totalorder %s21, 0
    %p275 = por %p273, %p274
    %p276 = scmp.ne.s32.totalorder %s262, %s263
    %p277 = scmp.eq.s32.totalorder %s22, 1
    %p278 = por %p276, %p277
    %p280 = scmp.ne.s32.totalorder %s263, %s279
    %p281 = scmp.eq.s32.totalorder %s22, 0
    %p282 = por %p280, %p281
    %s283 = ssub.s32 %s23, %s42
    %p284 = scmp.eq.s32.totalorder %s283, 0
    %s286 = sadd.s32 %s285, 1
    %s287 = scalar_select %p284, %s285, %s286
    %p290 = pneg %p284
    %p291 = scmp.eq.s32.totalorder %s16, 1
    %p292 = por %p290, %p291
    %p293 = scmp.ne.s32.totalorder %s285, %s288
    %p294 = scmp.eq.s32.totalorder %s16, 0
    %p295 = por %p293, %p294
    %p296 = scmp.ne.s32.totalorder %s285, %s288
    %p297 = scmp.eq.s32.totalorder %s21, 1
    %p298 = por %p296, %p297
    %p299 = scmp.ne.s32.totalorder %s288, %s289
    %p300 = scmp.eq.s32.totalorder %s21, 0
    %p301 = por %p299, %p300
    %p302 = scmp.ne.s32.totalorder %s288, %s289
    %p303 = scmp.eq.s32.totalorder %s22, 1
    %p304 = por %p302, %p303
    %p306 = scmp.ne.s32.totalorder %s289, %s305
    %p307 = scmp.eq.s32.totalorder %s22, 0
    %p308 = por %p306, %p307
    %p309 = scmp.le.s32.totalorder 1, %s16
    %p310 = scmp.lt.s32.totalorder %s16, 3
    %p311 = pnand %p309, %p310
    %p312 = pneg %p311
    // Predicated region
    $region9: #{_forward_arrays.1} parent=5 // pred_check
      _
    $region10: #{_forward_arrays.1} parent=5 // pred_check_branch
      %314 = sbr.rel (%p311) target = $region12
    $region11: #{_forward_arrays.1} parent=5 // pred_region
      %s315 = ssub.s32 %s16, 1
      // Predicated region
      $region13: #{_forward_arrays.1} parent=11 // pred_check
        %p316 = pneg %p89
      $region14: #{_forward_arrays.1} parent=11 // pred_check_branch
        %318 = sbr.rel (%p316) target = $region16
      $region15: #{_forward_arrays.1} parent=11 // pred_region
        %s319 = smul.u32 2, %s27
        %p320 = scmp.lt.s32.totalorder %s319, 1
        %s321 = scalar_select %p320, %s319, 1
        %p322 = scmp.lt.s32.totalorder %s28, 0
        %s323 = scalar_select %p322, %s28, 0
        %s324 = sadd.s32 %s323, %s321
        %s325 = smul.addr %s324, 8
        %s326 = scalar_lea.vmem %s1, %s325
        %s327 = smul.u32 2, %s27
      $region16: #{_forward_arrays.1} parent=11 // pred_fallthru
        _
      // Predicated region
      $region17: #{_forward_arrays.1} parent=11 // pred_check
        %p328 = pneg %p143
      $region18: #{_forward_arrays.1} parent=11 // pred_check_branch
        %330 = sbr.rel (%p328) target = $region20
      $region19: #{_forward_arrays.1} parent=11 // pred_region
        %s331 = smul.u32 2, %s27
        %p332 = scmp.lt.s32.totalorder %s331, 1
        %s333 = scalar_select %p332, %s331, 1
        %p334 = scmp.lt.s32.totalorder %s28, 0
        %s335 = scalar_select %p334, %s28, 0
        %s336 = sadd.s32 %s335, %s333
        %s337 = smul.addr %s336, 8
        %s338 = scalar_lea.vmem %s3, %s337
        %s339 = smul.u32 2, %s27
      $region20: #{_forward_arrays.1} parent=11 // pred_fallthru
        _
      // Predicated region
      $region21: #{_forward_arrays.1} parent=11 // pred_check
        %p340 = pneg %p197
      $region22: #{_forward_arrays.1} parent=11 // pred_check_branch
        %342 = sbr.rel (%p340) target = $region24
      $region23: #{_forward_arrays.1} parent=11 // pred_region
        %s343 = smul.u32 2, %s27
        %p344 = scmp.lt.s32.totalorder %s343, 1
        %s345 = scalar_select %p344, %s343, 1
        %p346 = scmp.lt.s32.totalorder %s28, 0
        %s347 = scalar_select %p346, %s28, 0
        %s348 = sadd.s32 %s347, %s345
        %s349 = smul.addr %s348, 8
        %s350 = scalar_lea.vmem %s5, %s349
        %s351 = smul.u32 2, %s27
      $region24: #{_forward_arrays.1} parent=11 // pred_fallthru
        _
      // Predicated region
      $region25: #{_forward_arrays.1} parent=11 // pred_check
        %p352 = pneg %p249
      $region26: #{_forward_arrays.1} parent=11 // pred_check_branch
        %354 = sbr.rel (%p352) target = $region28
      $region27: #{_forward_arrays.1} parent=11 // pred_region
        %s355 = smul.u32 2, %s27
        %p356 = scmp.lt.s32.totalorder %s355, 1
        %s357 = scalar_select %p356, %s355, 1
        %s358 = smul.addr %s357, 8
        %s359 = scalar_lea.vmem %s7, %s358
        %s360 = smul.u32 2, %s27
      $region28: #{_forward_arrays.1} parent=11 // pred_fallthru
        _
    $region12: #{_forward_arrays.1} parent=5 // pred_fallthru
      _
    %p361 = scmp.lt.s32.totalorder %s16, 2
    // Predicated region
    $region29: #{_forward_arrays.1} parent=5 // pred_check
      %p362 = pneg %p361
    $region30: #{_forward_arrays.1} parent=5 // pred_check_branch
      %364 = sbr.rel (%p362) target = $region32
    $region31: #{_forward_arrays.1} parent=5 // pred_region
      // Predicated region
      $region33: #{_forward_arrays.1} parent=31 // pred_check
        %p365 = pneg %p55
      $region34: #{_forward_arrays.1} parent=31 // pred_check_branch
        %367 = sbr.rel (%p365) target = $region36
      $region35: #{_forward_arrays.1} parent=31 // pred_region
        %p368 = scmp.lt.s32.totalorder %s23, 1
        %s369 = scalar_select %p368, %s23, 1
        %s370 = smul.addr %s369, 8
        %s371 = scalar_lea.vmem %s0, %s370
      $region36: #{_forward_arrays.1} parent=31 // pred_fallthru
        _
      // Predicated region
      $region37: #{_forward_arrays.1} parent=31 // pred_check
        %p372 = pneg %p109
      $region38: #{_forward_arrays.1} parent=31 // pred_check_branch
        %374 = sbr.rel (%p372) target = $region40
      $region39: #{_forward_arrays.1} parent=31 // pred_region
        %p375 = scmp.lt.s32.totalorder %s23, 1
        %s376 = scalar_select %p375, %s23, 1
        %s377 = smul.addr %s376, 8
        %s378 = scalar_lea.vmem %s2, %s377
      $region40: #{_forward_arrays.1} parent=31 // pred_fallthru
        _
      // Predicated region
      $region41: #{_forward_arrays.1} parent=31 // pred_check
        %p379 = pneg %p163
      $region42: #{_forward_arrays.1} parent=31 // pred_check_branch
        %381 = sbr.rel (%p379) target = $region44
      $region43: #{_forward_arrays.1} parent=31 // pred_region
        %p382 = scmp.lt.s32.totalorder %s23, 1
        %s383 = scalar_select %p382, %s23, 1
        %s384 = smul.addr %s383, 8
        %s385 = scalar_lea.vmem %s4, %s384
      $region44: #{_forward_arrays.1} parent=31 // pred_fallthru
        _
      // Predicated region
      $region45: #{_forward_arrays.1} parent=31 // pred_check
        %p386 = pneg %p217
      $region46: #{_forward_arrays.1} parent=31 // pred_check_branch
        %388 = sbr.rel (%p386) target = $region48
      $region47: #{_forward_arrays.1} parent=31 // pred_region
        %p389 = scmp.lt.s32.totalorder %s23, 1
        %s390 = scalar_select %p389, %s23, 1
        %s391 = smul.addr %s390, 8
        %s392 = scalar_lea.vmem %s6, %s391
      $region48: #{_forward_arrays.1} parent=31 // pred_fallthru
        _
    $region32: #{_forward_arrays.1} parent=5 // pred_fallthru
      _
    %p393 = scmp.le.s32.totalorder 1, %s16
    %p394 = scmp.lt.s32.totalorder %s16, 3
    %p395 = pnand %p393, %p394
    %p396 = pneg %p395
    // Predicated region
    $region49: #{_forward_arrays.1} parent=5 // pred_check
      _
    $region50: #{_forward_arrays.1} parent=5 // pred_check_branch
      %398 = sbr.rel (%p395) target = $region52
    $region51: #{_forward_arrays.1} parent=5 // pred_region
      %s399 = ssub.s32 %s16, 1
      %p400 = scmp.lt.s32.totalorder %s26, 1
      %s401 = scalar_select %p400, %s26, 1
      %s402 = smul.addr %s401, 8
      %s403 = scalar_lea.vmem %s0, %s402
      %p404 = pneg %p61
      %p405 = pneg %p58
      %s406 = smul.u32 2, %s27
      %p407 = scmp.lt.s32.totalorder %s406, 1
      %s408 = scalar_select %p407, %s406, 1
      %p409 = scmp.lt.s32.totalorder %s28, 0
      %s410 = scalar_select %p409, %s28, 0
      %s411 = sadd.s32 %s410, %s408
      %s412 = smul.addr %s411, 8
      %s413 = scalar_lea.vmem %s1, %s412
      %p414 = pneg %p89
      %p415 = pneg %p86
      %p416 = scmp.lt.s32.totalorder %s26, 1
      %s417 = scalar_select %p416, %s26, 1
      %s418 = smul.addr %s417, 8
      %s419 = scalar_lea.vmem %s2, %s418
      %p420 = pneg %p115
      %p421 = pneg %p112
      %s422 = smul.u32 2, %s27
      %p423 = scmp.lt.s32.totalorder %s422, 1
      %s424 = scalar_select %p423, %s422, 1
      %p425 = scmp.lt.s32.totalorder %s28, 0
      %s426 = scalar_select %p425, %s28, 0
      %s427 = sadd.s32 %s426, %s424
      %s428 = smul.addr %s427, 8
      %s429 = scalar_lea.vmem %s3, %s428
      %p430 = pneg %p143
      %p431 = pneg %p140
      %p432 = scmp.lt.s32.totalorder %s26, 1
      %s433 = scalar_select %p432, %s26, 1
      %s434 = smul.addr %s433, 8
      %s435 = scalar_lea.vmem %s4, %s434
      %p436 = pneg %p169
      %p437 = pneg %p166
      %s438 = smul.u32 2, %s27
      %p439 = scmp.lt.s32.totalorder %s438, 1
      %s440 = scalar_select %p439, %s438, 1
      %p441 = scmp.lt.s32.totalorder %s28, 0
      %s442 = scalar_select %p441, %s28, 0
      %s443 = sadd.s32 %s442, %s440
      %s444 = smul.addr %s443, 8
      %s445 = scalar_lea.vmem %s5, %s444
      %p446 = pneg %p197
      %p447 = pneg %p194
      %p448 = scmp.lt.s32.totalorder %s26, 1
      %s449 = scalar_select %p448, %s26, 1
      %s450 = smul.addr %s449, 8
      %s451 = scalar_lea.vmem %s6, %s450
      %p452 = pneg %p223
      %p453 = pneg %p220
      %s454 = smul.u32 2, %s27
      %p455 = scmp.lt.s32.totalorder %s454, 1
      %s456 = scalar_select %p455, %s454, 1
      %s457 = smul.addr %s456, 8
      %s458 = scalar_lea.vmem %s7, %s457
      %p459 = pneg %p249
      %p460 = pneg %p246
      %p461 = pneg %p275
      %p462 = pneg %p272
      %p463 = scmp.lt.s32.totalorder %s26, 1
      %s464 = scalar_select %p463, %s26, 1
      %s465 = smul.addr %s464, 8
      %s466 = scalar_lea.vmem %s8, %s465
      %p467 = pneg %p301
      %p468 = pneg %p298
      %p469 = scmp.lt.s32.totalorder %s26, 1
      %s470 = scalar_select %p469, %s26, 1
      %s471 = smul.addr %s470, 8
      %s472 = scalar_lea.vmem %s9, %s471
      %p473 = scmp.lt.s32.totalorder %s26, 1
      %s474 = scalar_select %p473, %s26, 1
      %s475 = smul.addr %s474, 8
      %s476 = scalar_lea.vmem %s0, %s475
      %s477 = smul.u32 2, %s27
      %p478 = scmp.lt.s32.totalorder %s477, 1
      %s479 = scalar_select %p478, %s477, 1
      %p480 = scmp.lt.s32.totalorder %s28, 0
      %s481 = scalar_select %p480, %s28, 0
      %s482 = sadd.s32 %s481, %s479
      %s483 = smul.addr %s482, 8
      %s484 = scalar_lea.vmem %s1, %s483
      %s485 = smul.u32 2, %s27
      %p486 = scmp.lt.s32.totalorder %s26, 1
      %s487 = scalar_select %p486, %s26, 1
      %s488 = smul.addr %s487, 8
      %s489 = scalar_lea.vmem %s2, %s488
      %s490 = smul.u32 2, %s27
      %p491 = scmp.lt.s32.totalorder %s490, 1
      %s492 = scalar_select %p491, %s490, 1
      %p493 = scmp.lt.s32.totalorder %s28, 0
      %s494 = scalar_select %p493, %s28, 0
      %s495 = sadd.s32 %s494, %s492
      %s496 = smul.addr %s495, 8
      %s497 = scalar_lea.vmem %s3, %s496
      %s498 = smul.u32 2, %s27
      %p499 = scmp.lt.s32.totalorder %s26, 1
      %s500 = scalar_select %p499, %s26, 1
      %s501 = smul.addr %s500, 8
      %s502 = scalar_lea.vmem %s4, %s501
      %s503 = smul.u32 2, %s27
      %p504 = scmp.lt.s32.totalorder %s503, 1
      %s505 = scalar_select %p504, %s503, 1
      %p506 = scmp.lt.s32.totalorder %s28, 0
      %s507 = scalar_select %p506, %s28, 0
      %s508 = sadd.s32 %s507, %s505
      %s509 = smul.addr %s508, 8
      %s510 = scalar_lea.vmem %s5, %s509
      %s511 = smul.u32 2, %s27
      %p512 = scmp.lt.s32.totalorder %s26, 1
      %s513 = scalar_select %p512, %s26, 1
      %s514 = smul.addr %s513, 8
      %s515 = scalar_lea.vmem %s6, %s514
      %s516 = smul.u32 2, %s27
      %p517 = scmp.lt.s32.totalorder %s516, 1
      %s518 = scalar_select %p517, %s516, 1
      %s519 = smul.addr %s518, 8
      %s520 = scalar_lea.vmem %s7, %s519
      %s521 = smul.u32 2, %s27
      %p522 = scmp.lt.s32.totalorder %s26, 1
      %s523 = scalar_select %p522, %s26, 1
      %s524 = smul.addr %s523, 8
      %s525 = scalar_lea.vmem %s8, %s524
      %p526 = scmp.lt.s32.totalorder %s26, 1
      %s527 = scalar_select %p526, %s26, 1
      %s528 = smul.addr %s527, 8
      %s529 = scalar_lea.vmem %s9, %s528
      %p530 = scmp.eq.s32.totalorder %s27, 0
      %p531 = scmp.eq.s32.totalorder %s28, 0
      %p532 = pnand %p530, %p531
      %p533 = pneg %p532
      // Predicated region
      $region53: #{_forward_arrays.1} parent=51 // pred_check
        _
      $region54: #{_forward_arrays.1} parent=51 // pred_check_branch
        %535 = sbr.rel (%p532) target = $region56
      $region55: #{_forward_arrays.1} parent=51 // pred_region
        %vm536 = vcmask 64512
        %537 = vst.msk [vmem:[%s525] sm:$0xff] %vm536, 0.0
        %538 = vst.msk [vmem:[%s529] sm:$0xff] %vm536, 0.0
      $region56: #{_forward_arrays.1} parent=51 // pred_fallthru
        _
      // Predicated region
      $region57: #{_forward_arrays.1} parent=51 // pred_check
        %p539 = pneg %p531
      $region58: #{_forward_arrays.1} parent=51 // pred_check_branch
        %541 = sbr.rel (%p539) target = $region60
      $region59: #{_forward_arrays.1} parent=51 // pred_region
        %vm542 = vcmask 130048
        %543 = vst.msk [vmem:[#allocation2] sm:$0xff] %vm542, 0.0
        %544 = vst.msk [vmem:[#allocation3] sm:$0xff] %vm542, 0.0
      $region60: #{_forward_arrays.1} parent=51 // pred_fallthru
        _
      %s545 = smul.u32 %s28, 128
      %s546 = sshra.s32 %s545, 7
      %s547 = sand.u32 %s545, 127
      %s548 = scalar_lea.vmem %s476, %s546
      %v549 = vld [vmem:[%s548] sm:$0xff]
      %s550 = scalar_lea.vmem %s489, %s546
      %v551 = vld [vmem:[%s550] sm:$0xff]
      %s552 = scalar_lea.vmem %s502, %s546
      %v553 = vld [vmem:[%s552] sm:$0xff]
      %v554 = vld [vmem:[%s484] sm:$0xff]
      %v555 = vld [vmem:[%s484 + $0x8] sm:$0xff]
      %v557 = vcombine.high %v549, %v549
      %v559 = vunpack.c.l.s4 1966171168
      %v560 = vunpack.c.0.s8 %v559
      %v561 = vlaneseq
      %v562 = vshrl.u32 %v561, 7
      %v563 = vsub.s32 %v560, %v562
      %v564 = vrot.slane %v549, %v563
      %v566 = vunpack.c.l.s4 1966171168
      %v567 = vunpack.c.0.s8 %v566
      %v568 = vlaneseq
      %v569 = vshrl.u32 %v568, 7
      %v570 = vsub.s32 %v567, %v569
      %v571 = vrot.slane %v557, %v570
      %v572 = vcombine.high %v564, %v564
      %v573 = vcombine.high %v571, %v571
      %v575 = vunpack.c.l.s4 1966171168
      %v576 = vunpack.c.0.s8 %v575
      %v577 = vlaneseq
      %v578 = vshrl.u32 %v577, 7
      %v579 = vsub.s32 %v576, %v578
      %v580 = vrot.slane %v564, %v579
      %v582 = vunpack.c.l.s4 1966171168
      %v583 = vunpack.c.0.s8 %v582
      %v584 = vlaneseq
      %v585 = vshrl.u32 %v584, 7
      %v586 = vsub.s32 %v583, %v585
      %v587 = vrot.slane %v571, %v586
      %v589 = vunpack.c.l.s4 1966171168
      %v590 = vunpack.c.0.s8 %v589
      %v591 = vlaneseq
      %v592 = vshrl.u32 %v591, 7
      %v593 = vsub.s32 %v590, %v592
      %v594 = vrot.slane %v572, %v593
      %v596 = vunpack.c.l.s4 1966171168
      %v597 = vunpack.c.0.s8 %v596
      %v598 = vlaneseq
      %v599 = vshrl.u32 %v598, 7
      %v600 = vsub.s32 %v597, %v599
      %v601 = vrot.slane %v573, %v600
      %v602 = vcombine.high %v580, %v580
      %v603 = vcombine.high %v587, %v587
      %v604 = vcombine.high %v594, %v594
      %v605 = vcombine.high %v601, %v601
      %v606 = vlaneseq
      %v607 = vshrl.u32 %v606, 7
      %v608 = vsub.s32 0, %v607
      %v609 = vrot.slane %v580, %v608
      %v610 = vlaneseq
      %v611 = vshrl.u32 %v610, 7
      %v612 = vsub.s32 0, %v611
      %v613 = vrot.slane %v594, %v612
      %v614 = vlaneseq
      %v615 = vshrl.u32 %v614, 7
      %v616 = vsub.s32 0, %v615
      %v617 = vrot.slane %v602, %v616
      %v618 = vlaneseq
      %v619 = vshrl.u32 %v618, 7
      %v620 = vsub.s32 0, %v619
      %v621 = vrot.slane %v604, %v620
      %v622 = vlaneseq
      %v623 = vshrl.u32 %v622, 7
      %v624 = vsub.s32 0, %v623
      %v625 = vrot.slane %v587, %v624
      %v626 = vlaneseq
      %v627 = vshrl.u32 %v626, 7
      %v628 = vsub.s32 0, %v627
      %v629 = vrot.slane %v601, %v628
      %v630 = vlaneseq
      %v631 = vshrl.u32 %v630, 7
      %v632 = vsub.s32 0, %v631
      %v633 = vrot.slane %v603, %v632
      %v634 = vlaneseq
      %v635 = vshrl.u32 %v634, 7
      %v636 = vsub.s32 0, %v635
      %v637 = vrot.slane %v605, %v636
      %v646 = vsub.f32 %v609, %v554
      %v647 = vsub.f32 %v609, %v555
      %v648 = vsub.f32 %v613, %v554
      %v649 = vsub.f32 %v613, %v555
      %v650 = vsub.f32 %v617, %v554
      %v651 = vsub.f32 %v617, %v555
      %v652 = vsub.f32 %v621, %v554
      %v653 = vsub.f32 %v621, %v555
      %v654 = vsub.f32 %v625, %v554
      %v655 = vsub.f32 %v625, %v555
      %v656 = vsub.f32 %v629, %v554
      %v657 = vsub.f32 %v629, %v555
      %v658 = vsub.f32 %v633, %v554
      %v659 = vsub.f32 %v633, %v555
      %v660 = vsub.f32 %v637, %v554
      %v661 = vsub.f32 %v637, %v555
      %v662 = vmul.f32 %v646, %v646
      %v663 = vmul.f32 %v647, %v647
      %v664 = vmul.f32 %v648, %v648
      %v665 = vmul.f32 %v649, %v649
      %v666 = vmul.f32 %v650, %v650
      %v667 = vmul.f32 %v651, %v651
      %v668 = vmul.f32 %v652, %v652
      %v669 = vmul.f32 %v653, %v653
      %v670 = vmul.f32 %v654, %v654
      %v671 = vmul.f32 %v655, %v655
      %v672 = vmul.f32 %v656, %v656
      %v673 = vmul.f32 %v657, %v657
      %v674 = vmul.f32 %v658, %v658
      %v675 = vmul.f32 %v659, %v659
      %v676 = vmul.f32 %v660, %v660
      %v677 = vmul.f32 %v661, %v661
      %v679 = vcombine.high %v551, %v551
      %v681 = vunpack.c.l.s4 1966171168
      %v682 = vunpack.c.0.s8 %v681
      %v683 = vlaneseq
      %v684 = vshrl.u32 %v683, 7
      %v685 = vsub.s32 %v682, %v684
      %v686 = vrot.slane %v551, %v685
      %v688 = vunpack.c.l.s4 1966171168
      %v689 = vunpack.c.0.s8 %v688
      %v690 = vlaneseq
      %v691 = vshrl.u32 %v690, 7
      %v692 = vsub.s32 %v689, %v691
      %v693 = vrot.slane %v679, %v692
      %v694 = vcombine.high %v686, %v686
      %v695 = vcombine.high %v693, %v693
      %v697 = vunpack.c.l.s4 1966171168
      %v698 = vunpack.c.0.s8 %v697
      %v699 = vlaneseq
      %v700 = vshrl.u32 %v699, 7
      %v701 = vsub.s32 %v698, %v700
      %v702 = vrot.slane %v686, %v701
      %v704 = vunpack.c.l.s4 1966171168
      %v705 = vunpack.c.0.s8 %v704
      %v706 = vlaneseq
      %v707 = vshrl.u32 %v706, 7
      %v708 = vsub.s32 %v705, %v707
      %v709 = vrot.slane %v693, %v708
      %v711 = vunpack.c.l.s4 1966171168
      %v712 = vunpack.c.0.s8 %v711
      %v713 = vlaneseq
      %v714 = vshrl.u32 %v713, 7
      %v715 = vsub.s32 %v712, %v714
      %v716 = vrot.slane %v694, %v715
      %v718 = vunpack.c.l.s4 1966171168
      %v719 = vunpack.c.0.s8 %v718
      %v720 = vlaneseq
      %v721 = vshrl.u32 %v720, 7
      %v722 = vsub.s32 %v719, %v721
      %v723 = vrot.slane %v695, %v722
      %v724 = vcombine.high %v702, %v702
      %v725 = vcombine.high %v709, %v709
      %v726 = vcombine.high %v716, %v716
      %v727 = vcombine.high %v723, %v723
      %v728 = vld [vmem:[%s497] sm:$0xff]
      %v729 = vld [vmem:[%s497 + $0x8] sm:$0xff]
      %v730 = vlaneseq
      %v731 = vshrl.u32 %v730, 7
      %v732 = vsub.s32 0, %v731
      %v733 = vrot.slane %v702, %v732
      %v734 = vlaneseq
      %v735 = vshrl.u32 %v734, 7
      %v736 = vsub.s32 0, %v735
      %v737 = vrot.slane %v716, %v736
      %v738 = vlaneseq
      %v739 = vshrl.u32 %v738, 7
      %v740 = vsub.s32 0, %v739
      %v741 = vrot.slane %v724, %v740
      %v742 = vlaneseq
      %v743 = vshrl.u32 %v742, 7
      %v744 = vsub.s32 0, %v743
      %v745 = vrot.slane %v726, %v744
      %v746 = vlaneseq
      %v747 = vshrl.u32 %v746, 7
      %v748 = vsub.s32 0, %v747
      %v749 = vrot.slane %v709, %v748
      %v750 = vlaneseq
      %v751 = vshrl.u32 %v750, 7
      %v752 = vsub.s32 0, %v751
      %v753 = vrot.slane %v723, %v752
      %v754 = vlaneseq
      %v755 = vshrl.u32 %v754, 7
      %v756 = vsub.s32 0, %v755
      %v757 = vrot.slane %v725, %v756
      %v758 = vlaneseq
      %v759 = vshrl.u32 %v758, 7
      %v760 = vsub.s32 0, %v759
      %v761 = vrot.slane %v727, %v760
      %v770 = vadd.f32 %v733, %v728
      %v771 = vadd.f32 %v733, %v729
      %v772 = vadd.f32 %v737, %v728
      %v773 = vadd.f32 %v737, %v729
      %v774 = vadd.f32 %v741, %v728
      %v775 = vadd.f32 %v741, %v729
      %v776 = vadd.f32 %v745, %v728
      %v777 = vadd.f32 %v745, %v729
      %v778 = vadd.f32 %v749, %v728
      %v779 = vadd.f32 %v749, %v729
      %v780 = vadd.f32 %v753, %v728
      %v781 = vadd.f32 %v753, %v729
      %v782 = vadd.f32 %v757, %v728
      %v783 = vadd.f32 %v757, %v729
      %v784 = vadd.f32 %v761, %v728
      %v785 = vadd.f32 %v761, %v729
      %v786 = vld [vmem:[#allocation2] sm:$0xff]
      %v787 = vrcp.pop %v770
      %v788 = vrcp.pop %v771
      %v789 = vrcp.pop %v772
      %v790 = vrcp.pop %v773
      %v791 = vrcp.pop %v774
      %v792 = vrcp.pop %v775
      %v793 = vrcp.pop %v776
      %v794 = vrcp.pop %v777
      %v795 = vrcp.pop %v778
      %v796 = vrcp.pop %v779
      %v797 = vrcp.pop %v780
      %v798 = vrcp.pop %v781
      %v799 = vrcp.pop %v782
      %v800 = vrcp.pop %v783
      %v801 = vrcp.pop %v784
      %v802 = vrcp.pop %v785
      %v803 = vmul.f32 %v770, %v787
      %v804 = vmul.f32 %v771, %v788
      %v805 = vmul.f32 %v772, %v789
      %v806 = vmul.f32 %v773, %v790
      %v807 = vmul.f32 %v774, %v791
      %v808 = vmul.f32 %v775, %v792
      %v809 = vmul.f32 %v776, %v793
      %v810 = vmul.f32 %v777, %v794
      %v811 = vmul.f32 %v778, %v795
      %v812 = vmul.f32 %v779, %v796
      %v813 = vmul.f32 %v780, %v797
      %v814 = vmul.f32 %v781, %v798
      %v815 = vmul.f32 %v782, %v799
      %v816 = vmul.f32 %v783, %v800
      %v817 = vmul.f32 %v784, %v801
      %v818 = vmul.f32 %v785, %v802
      %v819 = vsub.f32 2.0, %v803
      %v820 = vsub.f32 2.0, %v804
      %v821 = vsub.f32 2.0, %v805
      %v822 = vsub.f32 2.0, %v806
      %v823 = vsub.f32 2.0, %v807
      %v824 = vsub.f32 2.0, %v808
      %v825 = vsub.f32 2.0, %v809
      %v826 = vsub.f32 2.0, %v810
      %v827 = vsub.f32 2.0, %v811
      %v828 = vsub.f32 2.0, %v812
      %v829 = vsub.f32 2.0, %v813
      %v830 = vsub.f32 2.0, %v814
      %v831 = vsub.f32 2.0, %v815
      %v832 = vsub.f32 2.0, %v816
      %v833 = vsub.f32 2.0, %v817
      %v834 = vsub.f32 2.0, %v818
      %v835 = vmul.f32 %v787, %v819
      %v836 = vmul.f32 %v788, %v820
      %v837 = vmul.f32 %v789, %v821
      %v838 = vmul.f32 %v790, %v822
      %v839 = vmul.f32 %v791, %v823
      %v840 = vmul.f32 %v792, %v824
      %v841 = vmul.f32 %v793, %v825
      %v842 = vmul.f32 %v794, %v826
      %v843 = vmul.f32 %v795, %v827
      %v844 = vmul.f32 %v796, %v828
      %v845 = vmul.f32 %v797, %v829
      %v846 = vmul.f32 %v798, %v830
      %v847 = vmul.f32 %v799, %v831
      %v848 = vmul.f32 %v800, %v832
      %v849 = vmul.f32 %v801, %v833
      %v850 = vmul.f32 %v802, %v834
      %v851 = vmul.f32 %v662, %v835
      %v852 = vmul.f32 %v663, %v836
      %v853 = vmul.f32 %v664, %v837
      %v854 = vmul.f32 %v665, %v838
      %v855 = vmul.f32 %v666, %v839
      %v856 = vmul.f32 %v667, %v840
      %v857 = vmul.f32 %v668, %v841
      %v858 = vmul.f32 %v669, %v842
      %v859 = vmul.f32 %v670, %v843
      %v860 = vmul.f32 %v671, %v844
      %v861 = vmul.f32 %v672, %v845
      %v862 = vmul.f32 %v673, %v846
      %v863 = vmul.f32 %v674, %v847
      %v864 = vmul.f32 %v675, %v848
      %v865 = vmul.f32 %v676, %v849
      %v866 = vmul.f32 %v677, %v850
      %867 = vadd.xlane.f32.xlu0 %v851
      %v868 = vpop.xlane.xlu0 %867
      %869 = vadd.xlane.f32.xlu0 %v852
      %v870 = vpop.xlane.xlu0 %869
      %871 = vadd.xlane.f32.xlu0 %v853
      %v872 = vpop.xlane.xlu0 %871
      %873 = vadd.xlane.f32.xlu0 %v854
      %v874 = vpop.xlane.xlu0 %873
      %875 = vadd.xlane.f32.xlu0 %v855
      %v876 = vpop.xlane.xlu0 %875
      %877 = vadd.xlane.f32.xlu0 %v856
      %v878 = vpop.xlane.xlu0 %877
      %879 = vadd.xlane.f32.xlu0 %v857
      %v880 = vpop.xlane.xlu0 %879
      %881 = vadd.xlane.f32.xlu0 %v858
      %v882 = vpop.xlane.xlu0 %881
      %883 = vadd.xlane.f32.xlu0 %v859
      %v884 = vpop.xlane.xlu0 %883
      %885 = vadd.xlane.f32.xlu0 %v860
      %v886 = vpop.xlane.xlu0 %885
      %887 = vadd.xlane.f32.xlu0 %v861
      %v888 = vpop.xlane.xlu0 %887
      %889 = vadd.xlane.f32.xlu0 %v862
      %v890 = vpop.xlane.xlu0 %889
      %891 = vadd.xlane.f32.xlu0 %v863
      %v892 = vpop.xlane.xlu0 %891
      %893 = vadd.xlane.f32.xlu0 %v864
      %v894 = vpop.xlane.xlu0 %893
      %895 = vadd.xlane.f32.xlu0 %v865
      %v896 = vpop.xlane.xlu0 %895
      %897 = vadd.xlane.f32.xlu0 %v866
      %v898 = vpop.xlane.xlu0 %897
      %915 = vrot.lane.b32.xlu0 %v770, 112
      %v916 = vpop.permute.xlu0 %915
      %917 = vrot.lane.b32.xlu0 %v771, 112
      %v918 = vpop.permute.xlu0 %917
      %919 = vrot.lane.b32.xlu0 %v772, 112
      %v920 = vpop.permute.xlu0 %919
      %921 = vrot.lane.b32.xlu0 %v773, 112
      %v922 = vpop.permute.xlu0 %921
      %923 = vrot.lane.b32.xlu0 %v774, 112
      %v924 = vpop.permute.xlu0 %923
      %925 = vrot.lane.b32.xlu0 %v775, 112
      %v926 = vpop.permute.xlu0 %925
      %927 = vrot.lane.b32.xlu0 %v776, 112
      %v928 = vpop.permute.xlu0 %927
      %929 = vrot.lane.b32.xlu0 %v777, 112
      %v930 = vpop.permute.xlu0 %929
      %931 = vrot.lane.b32.xlu0 %v778, 112
      %v932 = vpop.permute.xlu0 %931
      %933 = vrot.lane.b32.xlu0 %v779, 112
      %v934 = vpop.permute.xlu0 %933
      %935 = vrot.lane.b32.xlu0 %v780, 112
      %v936 = vpop.permute.xlu0 %935
      %937 = vrot.lane.b32.xlu0 %v781, 112
      %v938 = vpop.permute.xlu0 %937
      %939 = vrot.lane.b32.xlu0 %v782, 112
      %v940 = vpop.permute.xlu0 %939
      %941 = vrot.lane.b32.xlu0 %v783, 112
      %v942 = vpop.permute.xlu0 %941
      %943 = vrot.lane.b32.xlu0 %v784, 112
      %v944 = vpop.permute.xlu0 %943
      %945 = vrot.lane.b32.xlu0 %v785, 112
      %v946 = vpop.permute.xlu0 %945
      %v963 = vmul.f32 %v770, %v916
      %v964 = vmul.f32 %v771, %v918
      %v965 = vmul.f32 %v772, %v920
      %v966 = vmul.f32 %v773, %v922
      %v967 = vmul.f32 %v774, %v924
      %v968 = vmul.f32 %v775, %v926
      %v969 = vmul.f32 %v776, %v928
      %v970 = vmul.f32 %v777, %v930
      %v971 = vmul.f32 %v778, %v932
      %v972 = vmul.f32 %v779, %v934
      %v973 = vmul.f32 %v780, %v936
      %v974 = vmul.f32 %v781, %v938
      %v975 = vmul.f32 %v782, %v940
      %v976 = vmul.f32 %v783, %v942
      %v977 = vmul.f32 %v784, %v944
      %v978 = vmul.f32 %v785, %v946
      %979 = vrot.lane.b32.xlu0 %v770, 96
      %v980 = vpop.permute.xlu0 %979
      %981 = vrot.lane.b32.xlu0 %v771, 96
      %v982 = vpop.permute.xlu0 %981
      %983 = vrot.lane.b32.xlu0 %v772, 96
      %v984 = vpop.permute.xlu0 %983
      %985 = vrot.lane.b32.xlu0 %v773, 96
      %v986 = vpop.permute.xlu0 %985
      %987 = vrot.lane.b32.xlu0 %v774, 96
      %v988 = vpop.permute.xlu0 %987
      %989 = vrot.lane.b32.xlu0 %v775, 96
      %v990 = vpop.permute.xlu0 %989
      %991 = vrot.lane.b32.xlu0 %v776, 96
      %v992 = vpop.permute.xlu0 %991
      %993 = vrot.lane.b32.xlu0 %v777, 96
      %v994 = vpop.permute.xlu0 %993
      %995 = vrot.lane.b32.xlu0 %v778, 96
      %v996 = vpop.permute.xlu0 %995
      %997 = vrot.lane.b32.xlu0 %v779, 96
      %v998 = vpop.permute.xlu0 %997
      %999 = vrot.lane.b32.xlu0 %v780, 96
      %v1000 = vpop.permute.xlu0 %999
      %1001 = vrot.lane.b32.xlu0 %v781, 96
      %v1002 = vpop.permute.xlu0 %1001
      %1003 = vrot.lane.b32.xlu0 %v782, 96
      %v1004 = vpop.permute.xlu0 %1003
      %1005 = vrot.lane.b32.xlu0 %v783, 96
      %v1006 = vpop.permute.xlu0 %1005
      %1007 = vrot.lane.b32.xlu0 %v784, 96
      %v1008 = vpop.permute.xlu0 %1007
      %1009 = vrot.lane.b32.xlu0 %v785, 96
      %v1010 = vpop.permute.xlu0 %1009
      %v1027 = vmul.f32 %v963, %v980
      %v1028 = vmul.f32 %v964, %v982
      %v1029 = vmul.f32 %v965, %v984
      %v1030 = vmul.f32 %v966, %v986
      %v1031 = vmul.f32 %v967, %v988
      %v1032 = vmul.f32 %v968, %v990
      %v1033 = vmul.f32 %v969, %v992
      %v1034 = vmul.f32 %v970, %v994
      %v1035 = vmul.f32 %v971, %v996
      %v1036 = vmul.f32 %v972, %v998
      %v1037 = vmul.f32 %v973, %v1000
      %v1038 = vmul.f32 %v974, %v1002
      %v1039 = vmul.f32 %v975, %v1004
      %v1040 = vmul.f32 %v976, %v1006
      %v1041 = vmul.f32 %v977, %v1008
      %v1042 = vmul.f32 %v978, %v1010
      %1043 = vrot.lane.b32.xlu0 %v770, 80
      %v1044 = vpop.permute.xlu0 %1043
      %1045 = vrot.lane.b32.xlu0 %v771, 80
      %v1046 = vpop.permute.xlu0 %1045
      %1047 = vrot.lane.b32.xlu0 %v772, 80
      %v1048 = vpop.permute.xlu0 %1047
      %1049 = vrot.lane.b32.xlu0 %v773, 80
      %v1050 = vpop.permute.xlu0 %1049
      %1051 = vrot.lane.b32.xlu0 %v774, 80
      %v1052 = vpop.permute.xlu0 %1051
      %1053 = vrot.lane.b32.xlu0 %v775, 80
      %v1054 = vpop.permute.xlu0 %1053
      %1055 = vrot.lane.b32.xlu0 %v776, 80
      %v1056 = vpop.permute.xlu0 %1055
      %1057 = vrot.lane.b32.xlu0 %v777, 80
      %v1058 = vpop.permute.xlu0 %1057
      %1059 = vrot.lane.b32.xlu0 %v778, 80
      %v1060 = vpop.permute.xlu0 %1059
      %1061 = vrot.lane.b32.xlu0 %v779, 80
      %v1062 = vpop.permute.xlu0 %1061
      %1063 = vrot.lane.b32.xlu0 %v780, 80
      %v1064 = vpop.permute.xlu0 %1063
      %1065 = vrot.lane.b32.xlu0 %v781, 80
      %v1066 = vpop.permute.xlu0 %1065
      %1067 = vrot.lane.b32.xlu0 %v782, 80
      %v1068 = vpop.permute.xlu0 %1067
      %1069 = vrot.lane.b32.xlu0 %v783, 80
      %v1070 = vpop.permute.xlu0 %1069
      %1071 = vrot.lane.b32.xlu0 %v784, 80
      %v1072 = vpop.permute.xlu0 %1071
      %1073 = vrot.lane.b32.xlu0 %v785, 80
      %v1074 = vpop.permute.xlu0 %1073
      %v1091 = vmul.f32 %v1027, %v1044
      %v1092 = vmul.f32 %v1028, %v1046
      %v1093 = vmul.f32 %v1029, %v1048
      %v1094 = vmul.f32 %v1030, %v1050
      %v1095 = vmul.f32 %v1031, %v1052
      %v1096 = vmul.f32 %v1032, %v1054
      %v1097 = vmul.f32 %v1033, %v1056
      %v1098 = vmul.f32 %v1034, %v1058
      %v1099 = vmul.f32 %v1035, %v1060
      %v1100 = vmul.f32 %v1036, %v1062
      %v1101 = vmul.f32 %v1037, %v1064
      %v1102 = vmul.f32 %v1038, %v1066
      %v1103 = vmul.f32 %v1039, %v1068
      %v1104 = vmul.f32 %v1040, %v1070
      %v1105 = vmul.f32 %v1041, %v1072
      %v1106 = vmul.f32 %v1042, %v1074
      %1107 = vrot.lane.b32.xlu0 %v770, 64
      %v1108 = vpop.permute.xlu0 %1107
      %1109 = vrot.lane.b32.xlu0 %v771, 64
      %v1110 = vpop.permute.xlu0 %1109
      %1111 = vrot.lane.b32.xlu0 %v772, 64
      %v1112 = vpop.permute.xlu0 %1111
      %1113 = vrot.lane.b32.xlu0 %v773, 64
      %v1114 = vpop.permute.xlu0 %1113
      %1115 = vrot.lane.b32.xlu0 %v774, 64
      %v1116 = vpop.permute.xlu0 %1115
      %1117 = vrot.lane.b32.xlu0 %v775, 64
      %v1118 = vpop.permute.xlu0 %1117
      %1119 = vrot.lane.b32.xlu0 %v776, 64
      %v1120 = vpop.permute.xlu0 %1119
      %1121 = vrot.lane.b32.xlu0 %v777, 64
      %v1122 = vpop.permute.xlu0 %1121
      %1123 = vrot.lane.b32.xlu0 %v778, 64
      %v1124 = vpop.permute.xlu0 %1123
      %1125 = vrot.lane.b32.xlu0 %v779, 64
      %v1126 = vpop.permute.xlu0 %1125
      %1127 = vrot.lane.b32.xlu0 %v780, 64
      %v1128 = vpop.permute.xlu0 %1127
      %1129 = vrot.lane.b32.xlu0 %v781, 64
      %v1130 = vpop.permute.xlu0 %1129
      %1131 = vrot.lane.b32.xlu0 %v782, 64
      %v1132 = vpop.permute.xlu0 %1131
      %1133 = vrot.lane.b32.xlu0 %v783, 64
      %v1134 = vpop.permute.xlu0 %1133
      %1135 = vrot.lane.b32.xlu0 %v784, 64
      %v1136 = vpop.permute.xlu0 %1135
      %1137 = vrot.lane.b32.xlu0 %v785, 64
      %v1138 = vpop.permute.xlu0 %1137
      %v1155 = vmul.f32 %v1091, %v1108
      %v1156 = vmul.f32 %v1092, %v1110
      %v1157 = vmul.f32 %v1093, %v1112
      %v1158 = vmul.f32 %v1094, %v1114
      %v1159 = vmul.f32 %v1095, %v1116
      %v1160 = vmul.f32 %v1096, %v1118
      %v1161 = vmul.f32 %v1097, %v1120
      %v1162 = vmul.f32 %v1098, %v1122
      %v1163 = vmul.f32 %v1099, %v1124
      %v1164 = vmul.f32 %v1100, %v1126
      %v1165 = vmul.f32 %v1101, %v1128
      %v1166 = vmul.f32 %v1102, %v1130
      %v1167 = vmul.f32 %v1103, %v1132
      %v1168 = vmul.f32 %v1104, %v1134
      %v1169 = vmul.f32 %v1105, %v1136
      %v1170 = vmul.f32 %v1106, %v1138
      %1171 = vrot.lane.b32.xlu0 %v770, 48
      %v1172 = vpop.permute.xlu0 %1171
      %1173 = vrot.lane.b32.xlu0 %v771, 48
      %v1174 = vpop.permute.xlu0 %1173
      %1175 = vrot.lane.b32.xlu0 %v772, 48
      %v1176 = vpop.permute.xlu0 %1175
      %1177 = vrot.lane.b32.xlu0 %v773, 48
      %v1178 = vpop.permute.xlu0 %1177
      %1179 = vrot.lane.b32.xlu0 %v774, 48
      %v1180 = vpop.permute.xlu0 %1179
      %1181 = vrot.lane.b32.xlu0 %v775, 48
      %v1182 = vpop.permute.xlu0 %1181
      %1183 = vrot.lane.b32.xlu0 %v776, 48
      %v1184 = vpop.permute.xlu0 %1183
      %1185 = vrot.lane.b32.xlu0 %v777, 48
      %v1186 = vpop.permute.xlu0 %1185
      %1187 = vrot.lane.b32.xlu0 %v778, 48
      %v1188 = vpop.permute.xlu0 %1187
      %1189 = vrot.lane.b32.xlu0 %v779, 48
      %v1190 = vpop.permute.xlu0 %1189
      %1191 = vrot.lane.b32.xlu0 %v780, 48
      %v1192 = vpop.permute.xlu0 %1191
      %1193 = vrot.lane.b32.xlu0 %v781, 48
      %v1194 = vpop.permute.xlu0 %1193
      %1195 = vrot.lane.b32.xlu0 %v782, 48
      %v1196 = vpop.permute.xlu0 %1195
      %1197 = vrot.lane.b32.xlu0 %v783, 48
      %v1198 = vpop.permute.xlu0 %1197
      %1199 = vrot.lane.b32.xlu0 %v784, 48
      %v1200 = vpop.permute.xlu0 %1199
      %1201 = vrot.lane.b32.xlu0 %v785, 48
      %v1202 = vpop.permute.xlu0 %1201
      %v1219 = vmul.f32 %v1155, %v1172
      %v1220 = vmul.f32 %v1156, %v1174
      %v1221 = vmul.f32 %v1157, %v1176
      %v1222 = vmul.f32 %v1158, %v1178
      %v1223 = vmul.f32 %v1159, %v1180
      %v1224 = vmul.f32 %v1160, %v1182
      %v1225 = vmul.f32 %v1161, %v1184
      %v1226 = vmul.f32 %v1162, %v1186
      %v1227 = vmul.f32 %v1163, %v1188
      %v1228 = vmul.f32 %v1164, %v1190
      %v1229 = vmul.f32 %v1165, %v1192
      %v1230 = vmul.f32 %v1166, %v1194
      %v1231 = vmul.f32 %v1167, %v1196
      %v1232 = vmul.f32 %v1168, %v1198
      %v1233 = vmul.f32 %v1169, %v1200
      %v1234 = vmul.f32 %v1170, %v1202
      %1235 = vrot.lane.b32.xlu0 %v770, 32
      %v1236 = vpop.permute.xlu0 %1235
      %1237 = vrot.lane.b32.xlu0 %v771, 32
      %v1238 = vpop.permute.xlu0 %1237
      %1239 = vrot.lane.b32.xlu0 %v772, 32
      %v1240 = vpop.permute.xlu0 %1239
      %1241 = vrot.lane.b32.xlu0 %v773, 32
      %v1242 = vpop.permute.xlu0 %1241
      %1243 = vrot.lane.b32.xlu0 %v774, 32
      %v1244 = vpop.permute.xlu0 %1243
      %1245 = vrot.lane.b32.xlu0 %v775, 32
      %v1246 = vpop.permute.xlu0 %1245
      %1247 = vrot.lane.b32.xlu0 %v776, 32
      %v1248 = vpop.permute.xlu0 %1247
      %1249 = vrot.lane.b32.xlu0 %v777, 32
      %v1250 = vpop.permute.xlu0 %1249
      %1251 = vrot.lane.b32.xlu0 %v778, 32
      %v1252 = vpop.permute.xlu0 %1251
      %1253 = vrot.lane.b32.xlu0 %v779, 32
      %v1254 = vpop.permute.xlu0 %1253
      %1255 = vrot.lane.b32.xlu0 %v780, 32
      %v1256 = vpop.permute.xlu0 %1255
      %1257 = vrot.lane.b32.xlu0 %v781, 32
      %v1258 = vpop.permute.xlu0 %1257
      %1259 = vrot.lane.b32.xlu0 %v782, 32
      %v1260 = vpop.permute.xlu0 %1259
      %1261 = vrot.lane.b32.xlu0 %v783, 32
      %v1262 = vpop.permute.xlu0 %1261
      %1263 = vrot.lane.b32.xlu0 %v784, 32
      %v1264 = vpop.permute.xlu0 %1263
      %1265 = vrot.lane.b32.xlu0 %v785, 32
      %v1266 = vpop.permute.xlu0 %1265
      %v1283 = vmul.f32 %v1219, %v1236
      %v1284 = vmul.f32 %v1220, %v1238
      %v1285 = vmul.f32 %v1221, %v1240
      %v1286 = vmul.f32 %v1222, %v1242
      %v1287 = vmul.f32 %v1223, %v1244
      %v1288 = vmul.f32 %v1224, %v1246
      %v1289 = vmul.f32 %v1225, %v1248
      %v1290 = vmul.f32 %v1226, %v1250
      %v1291 = vmul.f32 %v1227, %v1252
      %v1292 = vmul.f32 %v1228, %v1254
      %v1293 = vmul.f32 %v1229, %v1256
      %v1294 = vmul.f32 %v1230, %v1258
      %v1295 = vmul.f32 %v1231, %v1260
      %v1296 = vmul.f32 %v1232, %v1262
      %v1297 = vmul.f32 %v1233, %v1264
      %v1298 = vmul.f32 %v1234, %v1266
      %1299 = vrot.lane.b32.xlu0 %v770, 16
      %v1300 = vpop.permute.xlu0 %1299
      %1301 = vrot.lane.b32.xlu0 %v771, 16
      %v1302 = vpop.permute.xlu0 %1301
      %1303 = vrot.lane.b32.xlu0 %v772, 16
      %v1304 = vpop.permute.xlu0 %1303
      %1305 = vrot.lane.b32.xlu0 %v773, 16
      %v1306 = vpop.permute.xlu0 %1305
      %1307 = vrot.lane.b32.xlu0 %v774, 16
      %v1308 = vpop.permute.xlu0 %1307
      %1309 = vrot.lane.b32.xlu0 %v775, 16
      %v1310 = vpop.permute.xlu0 %1309
      %1311 = vrot.lane.b32.xlu0 %v776, 16
      %v1312 = vpop.permute.xlu0 %1311
      %1313 = vrot.lane.b32.xlu0 %v777, 16
      %v1314 = vpop.permute.xlu0 %1313
      %1315 = vrot.lane.b32.xlu0 %v778, 16
      %v1316 = vpop.permute.xlu0 %1315
      %1317 = vrot.lane.b32.xlu0 %v779, 16
      %v1318 = vpop.permute.xlu0 %1317
      %1319 = vrot.lane.b32.xlu0 %v780, 16
      %v1320 = vpop.permute.xlu0 %1319
      %1321 = vrot.lane.b32.xlu0 %v781, 16
      %v1322 = vpop.permute.xlu0 %1321
      %1323 = vrot.lane.b32.xlu0 %v782, 16
      %v1324 = vpop.permute.xlu0 %1323
      %1325 = vrot.lane.b32.xlu0 %v783, 16
      %v1326 = vpop.permute.xlu0 %1325
      %1327 = vrot.lane.b32.xlu0 %v784, 16
      %v1328 = vpop.permute.xlu0 %1327
      %1329 = vrot.lane.b32.xlu0 %v785, 16
      %v1330 = vpop.permute.xlu0 %1329
      %v1347 = vmul.f32 %v1283, %v1300
      %v1348 = vmul.f32 %v1284, %v1302
      %v1349 = vmul.f32 %v1285, %v1304
      %v1350 = vmul.f32 %v1286, %v1306
      %v1351 = vmul.f32 %v1287, %v1308
      %v1352 = vmul.f32 %v1288, %v1310
      %v1353 = vmul.f32 %v1289, %v1312
      %v1354 = vmul.f32 %v1290, %v1314
      %v1355 = vmul.f32 %v1291, %v1316
      %v1356 = vmul.f32 %v1292, %v1318
      %v1357 = vmul.f32 %v1293, %v1320
      %v1358 = vmul.f32 %v1294, %v1322
      %v1359 = vmul.f32 %v1295, %v1324
      %v1360 = vmul.f32 %v1296, %v1326
      %v1361 = vmul.f32 %v1297, %v1328
      %v1362 = vmul.f32 %v1298, %v1330
      %v1363 = vlog2.pop %v1347
      %v1364 = vmul.f32 %v1363, 0.6931472
      %v1365 = vlog2.pop %v1348
      %v1366 = vmul.f32 %v1365, 0.6931472
      %v1367 = vlog2.pop %v1349
      %v1368 = vmul.f32 %v1367, 0.6931472
      %v1369 = vlog2.pop %v1350
      %v1370 = vmul.f32 %v1369, 0.6931472
      %v1371 = vlog2.pop %v1351
      %v1372 = vmul.f32 %v1371, 0.6931472
      %v1373 = vlog2.pop %v1352
      %v1374 = vmul.f32 %v1373, 0.6931472
      %v1375 = vlog2.pop %v1353
      %v1376 = vmul.f32 %v1375, 0.6931472
      %v1377 = vlog2.pop %v1354
      %v1378 = vmul.f32 %v1377, 0.6931472
      %v1379 = vlog2.pop %v1355
      %v1380 = vmul.f32 %v1379, 0.6931472
      %v1381 = vlog2.pop %v1356
      %v1382 = vmul.f32 %v1381, 0.6931472
      %v1383 = vlog2.pop %v1357
      %v1384 = vmul.f32 %v1383, 0.6931472
      %v1385 = vlog2.pop %v1358
      %v1386 = vmul.f32 %v1385, 0.6931472
      %v1387 = vlog2.pop %v1359
      %v1388 = vmul.f32 %v1387, 0.6931472
      %v1389 = vlog2.pop %v1360
      %v1390 = vmul.f32 %v1389, 0.6931472
      %v1391 = vlog2.pop %v1361
      %v1392 = vmul.f32 %v1391, 0.6931472
      %v1393 = vlog2.pop %v1362
      %v1394 = vmul.f32 %v1393, 0.6931472
      %vm1395 = vcmask 130048
      %v1396 = vsel %vm1395, %v1364, 0.0
      %1397 = vadd.xlane.f32.xlu0 %v1396
      %v1398 = vpop.xlane.xlu0 %1397
      %v1399 = vsel %vm1395, %v1366, 0.0
      %1400 = vadd.xlane.f32.xlu0 %v1399
      %v1401 = vpop.xlane.xlu0 %1400
      %v1402 = vsel %vm1395, %v1368, 0.0
      %1403 = vadd.xlane.f32.xlu0 %v1402
      %v1404 = vpop.xlane.xlu0 %1403
      %v1405 = vsel %vm1395, %v1370, 0.0
      %1406 = vadd.xlane.f32.xlu0 %v1405
      %v1407 = vpop.xlane.xlu0 %1406
      %v1408 = vsel %vm1395, %v1372, 0.0
      %1409 = vadd.xlane.f32.xlu0 %v1408
      %v1410 = vpop.xlane.xlu0 %1409
      %v1411 = vsel %vm1395, %v1374, 0.0
      %1412 = vadd.xlane.f32.xlu0 %v1411
      %v1413 = vpop.xlane.xlu0 %1412
      %v1414 = vsel %vm1395, %v1376, 0.0
      %1415 = vadd.xlane.f32.xlu0 %v1414
      %v1416 = vpop.xlane.xlu0 %1415
      %v1417 = vsel %vm1395, %v1378, 0.0
      %1418 = vadd.xlane.f32.xlu0 %v1417
      %v1419 = vpop.xlane.xlu0 %1418
      %v1420 = vsel %vm1395, %v1380, 0.0
      %1421 = vadd.xlane.f32.xlu0 %v1420
      %v1422 = vpop.xlane.xlu0 %1421
      %v1423 = vsel %vm1395, %v1382, 0.0
      %1424 = vadd.xlane.f32.xlu0 %v1423
      %v1425 = vpop.xlane.xlu0 %1424
      %v1426 = vsel %vm1395, %v1384, 0.0
      %1427 = vadd.xlane.f32.xlu0 %v1426
      %v1428 = vpop.xlane.xlu0 %1427
      %v1429 = vsel %vm1395, %v1386, 0.0
      %1430 = vadd.xlane.f32.xlu0 %v1429
      %v1431 = vpop.xlane.xlu0 %1430
      %v1432 = vsel %vm1395, %v1388, 0.0
      %1433 = vadd.xlane.f32.xlu0 %v1432
      %v1434 = vpop.xlane.xlu0 %1433
      %v1435 = vsel %vm1395, %v1390, 0.0
      %1436 = vadd.xlane.f32.xlu0 %v1435
      %v1437 = vpop.xlane.xlu0 %1436
      %v1438 = vsel %vm1395, %v1392, 0.0
      %1439 = vadd.xlane.f32.xlu0 %v1438
      %v1440 = vpop.xlane.xlu0 %1439
      %v1441 = vsel %vm1395, %v1394, 0.0
      %1442 = vadd.xlane.f32.xlu0 %v1441
      %v1443 = vpop.xlane.xlu0 %1442
      %v1444 = vadd.f32 %v868, %v1398
      %v1445 = vadd.f32 %v870, %v1401
      %v1446 = vadd.f32 %v872, %v1404
      %v1447 = vadd.f32 %v874, %v1407
      %v1448 = vadd.f32 %v876, %v1410
      %v1449 = vadd.f32 %v878, %v1413
      %v1450 = vadd.f32 %v880, %v1416
      %v1451 = vadd.f32 %v882, %v1419
      %v1452 = vadd.f32 %v884, %v1422
      %v1453 = vadd.f32 %v886, %v1425
      %v1454 = vadd.f32 %v888, %v1428
      %v1455 = vadd.f32 %v890, %v1431
      %v1456 = vadd.f32 %v892, %v1434
      %v1457 = vadd.f32 %v894, %v1437
      %v1458 = vadd.f32 %v896, %v1440
      %v1459 = vadd.f32 %v898, %v1443
      %v1476 = vlaneseq
      %v1477 = vand.u32 %v1476, 127
      %v1478 = vlaneseq
      %v1479 = vshrl.u32 %v1478, 7
      %v1480 = vsub.s32 %v1477, %v1479
      %v1481 = vrot.slane %v1444, %v1480
      %v1482 = vadd.s32 %v1477, 4294967288
      %v1483 = vlaneseq
      %v1484 = vshrl.u32 %v1483, 7
      %v1485 = vsub.s32 %v1482, %v1484
      %v1486 = vrot.slane %v1445, %v1485
      %vm1487 = vcmask 130112
      %v1488 = vsel %vm1487, %v1486, %v1481
      %v1489 = vlaneseq
      %v1490 = vshrl.u32 %v1489, 7
      %v1491 = vsub.s32 %v1477, %v1490
      %v1492 = vrot.slane %v1446, %v1491
      %v1493 = vlaneseq
      %v1494 = vshrl.u32 %v1493, 7
      %v1495 = vsub.s32 %v1482, %v1494
      %v1496 = vrot.slane %v1447, %v1495
      %v1497 = vsel %vm1487, %v1496, %v1492
      %v1498 = vlaneseq
      %v1499 = vshrl.u32 %v1498, 7
      %v1500 = vsub.s32 %v1477, %v1499
      %v1501 = vrot.slane %v1448, %v1500
      %v1502 = vlaneseq
      %v1503 = vshrl.u32 %v1502, 7
      %v1504 = vsub.s32 %v1482, %v1503
      %v1505 = vrot.slane %v1449, %v1504
      %v1506 = vsel %vm1487, %v1505, %v1501
      %v1507 = vlaneseq
      %v1508 = vshrl.u32 %v1507, 7
      %v1509 = vsub.s32 %v1477, %v1508
      %v1510 = vrot.slane %v1450, %v1509
      %v1511 = vlaneseq
      %v1512 = vshrl.u32 %v1511, 7
      %v1513 = vsub.s32 %v1482, %v1512
      %v1514 = vrot.slane %v1451, %v1513
      %v1515 = vsel %vm1487, %v1514, %v1510
      %v1516 = vlaneseq
      %v1517 = vshrl.u32 %v1516, 7
      %v1518 = vsub.s32 %v1477, %v1517
      %v1519 = vrot.slane %v1452, %v1518
      %v1520 = vlaneseq
      %v1521 = vshrl.u32 %v1520, 7
      %v1522 = vsub.s32 %v1482, %v1521
      %v1523 = vrot.slane %v1453, %v1522
      %v1524 = vsel %vm1487, %v1523, %v1519
      %v1525 = vlaneseq
      %v1526 = vshrl.u32 %v1525, 7
      %v1527 = vsub.s32 %v1477, %v1526
      %v1528 = vrot.slane %v1454, %v1527
      %v1529 = vlaneseq
      %v1530 = vshrl.u32 %v1529, 7
      %v1531 = vsub.s32 %v1482, %v1530
      %v1532 = vrot.slane %v1455, %v1531
      %v1533 = vsel %vm1487, %v1532, %v1528
      %v1534 = vlaneseq
      %v1535 = vshrl.u32 %v1534, 7
      %v1536 = vsub.s32 %v1477, %v1535
      %v1537 = vrot.slane %v1456, %v1536
      %v1538 = vlaneseq
      %v1539 = vshrl.u32 %v1538, 7
      %v1540 = vsub.s32 %v1482, %v1539
      %v1541 = vrot.slane %v1457, %v1540
      %v1542 = vsel %vm1487, %v1541, %v1537
      %v1543 = vlaneseq
      %v1544 = vshrl.u32 %v1543, 7
      %v1545 = vsub.s32 %v1477, %v1544
      %v1546 = vrot.slane %v1458, %v1545
      %v1547 = vlaneseq
      %v1548 = vshrl.u32 %v1547, 7
      %v1549 = vsub.s32 %v1482, %v1548
      %v1550 = vrot.slane %v1459, %v1549
      %v1551 = vsel %vm1487, %v1550, %v1546
      %vm1552 = vcmask 1041409
      %v1553 = vsel %vm1552, %v1497, %v1488
      %vm1554 = vcmask 1042434
      %v1555 = vsel %vm1554, %v1506, %v1553
      %vm1556 = vcmask 1043459
      %v1557 = vsel %vm1556, %v1515, %v1555
      %vm1558 = vcmask 1044484
      %v1559 = vsel %vm1558, %v1524, %v1557
      %vm1560 = vcmask 1045509
      %v1561 = vsel %vm1560, %v1533, %v1559
      %vm1562 = vcmask 1046534
      %v1563 = vsel %vm1562, %v1542, %v1561
      %vm1564 = vcmask 1047559
      %v1565 = vsel %vm1564, %v1551, %v1563
      %v1567 = vadd.f32 %v786, %v1565
      %1568 = vst.msk [vmem:[#allocation2] sm:$0xff] %vm1395, %v1567
      %v1570 = vcombine.high %v553, %v553
      %v1572 = vunpack.c.l.s4 1966171168
      %v1573 = vunpack.c.0.s8 %v1572
      %v1574 = vlaneseq
      %v1575 = vshrl.u32 %v1574, 7
      %v1576 = vsub.s32 %v1573, %v1575
      %v1577 = vrot.slane %v553, %v1576
      %v1579 = vunpack.c.l.s4 1966171168
      %v1580 = vunpack.c.0.s8 %v1579
      %v1581 = vlaneseq
      %v1582 = vshrl.u32 %v1581, 7
      %v1583 = vsub.s32 %v1580, %v1582
      %v1584 = vrot.slane %v1570, %v1583
      %v1585 = vcombine.high %v1577, %v1577
      %v1586 = vcombine.high %v1584, %v1584
      %v1588 = vunpack.c.l.s4 1966171168
      %v1589 = vunpack.c.0.s8 %v1588
      %v1590 = vlaneseq
      %v1591 = vshrl.u32 %v1590, 7
      %v1592 = vsub.s32 %v1589, %v1591
      %v1593 = vrot.slane %v1577, %v1592
      %v1595 = vunpack.c.l.s4 1966171168
      %v1596 = vunpack.c.0.s8 %v1595
      %v1597 = vlaneseq
      %v1598 = vshrl.u32 %v1597, 7
      %v1599 = vsub.s32 %v1596, %v1598
      %v1600 = vrot.slane %v1584, %v1599
      %v1602 = vunpack.c.l.s4 1966171168
      %v1603 = vunpack.c.0.s8 %v1602
      %v1604 = vlaneseq
      %v1605 = vshrl.u32 %v1604, 7
      %v1606 = vsub.s32 %v1603, %v1605
      %v1607 = vrot.slane %v1585, %v1606
      %v1609 = vunpack.c.l.s4 1966171168
      %v1610 = vunpack.c.0.s8 %v1609
      %v1611 = vlaneseq
      %v1612 = vshrl.u32 %v1611, 7
      %v1613 = vsub.s32 %v1610, %v1612
      %v1614 = vrot.slane %v1586, %v1613
      %v1615 = vcombine.high %v1593, %v1593
      %v1616 = vcombine.high %v1600, %v1600
      %v1617 = vcombine.high %v1607, %v1607
      %v1618 = vcombine.high %v1614, %v1614
      %v1619 = vld [vmem:[%s510] sm:$0xff]
      %v1620 = vld [vmem:[%s510 + $0x8] sm:$0xff]
      %v1621 = vlaneseq
      %v1622 = vshrl.u32 %v1621, 7
      %v1623 = vsub.s32 0, %v1622
      %v1624 = vrot.slane %v1593, %v1623
      %v1625 = vlaneseq
      %v1626 = vshrl.u32 %v1625, 7
      %v1627 = vsub.s32 0, %v1626
      %v1628 = vrot.slane %v1607, %v1627
      %v1629 = vlaneseq
      %v1630 = vshrl.u32 %v1629, 7
      %v1631 = vsub.s32 0, %v1630
      %v1632 = vrot.slane %v1615, %v1631
      %v1633 = vlaneseq
      %v1634 = vshrl.u32 %v1633, 7
      %v1635 = vsub.s32 0, %v1634
      %v1636 = vrot.slane %v1617, %v1635
      %v1637 = vlaneseq
      %v1638 = vshrl.u32 %v1637, 7
      %v1639 = vsub.s32 0, %v1638
      %v1640 = vrot.slane %v1600, %v1639
      %v1641 = vlaneseq
      %v1642 = vshrl.u32 %v1641, 7
      %v1643 = vsub.s32 0, %v1642
      %v1644 = vrot.slane %v1614, %v1643
      %v1645 = vlaneseq
      %v1646 = vshrl.u32 %v1645, 7
      %v1647 = vsub.s32 0, %v1646
      %v1648 = vrot.slane %v1616, %v1647
      %v1649 = vlaneseq
      %v1650 = vshrl.u32 %v1649, 7
      %v1651 = vsub.s32 0, %v1650
      %v1652 = vrot.slane %v1618, %v1651
      %v1661 = vadd.f32 %v1624, %v1619
      %v1662 = vadd.f32 %v1624, %v1620
      %v1663 = vadd.f32 %v1628, %v1619
      %v1664 = vadd.f32 %v1628, %v1620
      %v1665 = vadd.f32 %v1632, %v1619
      %v1666 = vadd.f32 %v1632, %v1620
      %v1667 = vadd.f32 %v1636, %v1619
      %v1668 = vadd.f32 %v1636, %v1620
      %v1669 = vadd.f32 %v1640, %v1619
      %v1670 = vadd.f32 %v1640, %v1620
      %v1671 = vadd.f32 %v1644, %v1619
      %v1672 = vadd.f32 %v1644, %v1620
      %v1673 = vadd.f32 %v1648, %v1619
      %v1674 = vadd.f32 %v1648, %v1620
      %v1675 = vadd.f32 %v1652, %v1619
      %v1676 = vadd.f32 %v1652, %v1620
      %v1677 = vld [vmem:[#allocation3] sm:$0xff]
      %v1678 = vrcp.pop %v1661
      %v1679 = vrcp.pop %v1662
      %v1680 = vrcp.pop %v1663
      %v1681 = vrcp.pop %v1664
      %v1682 = vrcp.pop %v1665
      %v1683 = vrcp.pop %v1666
      %v1684 = vrcp.pop %v1667
      %v1685 = vrcp.pop %v1668
      %v1686 = vrcp.pop %v1669
      %v1687 = vrcp.pop %v1670
      %v1688 = vrcp.pop %v1671
      %v1689 = vrcp.pop %v1672
      %v1690 = vrcp.pop %v1673
      %v1691 = vrcp.pop %v1674
      %v1692 = vrcp.pop %v1675
      %v1693 = vrcp.pop %v1676
      %v1694 = vmul.f32 %v1661, %v1678
      %v1695 = vmul.f32 %v1662, %v1679
      %v1696 = vmul.f32 %v1663, %v1680
      %v1697 = vmul.f32 %v1664, %v1681
      %v1698 = vmul.f32 %v1665, %v1682
      %v1699 = vmul.f32 %v1666, %v1683
      %v1700 = vmul.f32 %v1667, %v1684
      %v1701 = vmul.f32 %v1668, %v1685
      %v1702 = vmul.f32 %v1669, %v1686
      %v1703 = vmul.f32 %v1670, %v1687
      %v1704 = vmul.f32 %v1671, %v1688
      %v1705 = vmul.f32 %v1672, %v1689
      %v1706 = vmul.f32 %v1673, %v1690
      %v1707 = vmul.f32 %v1674, %v1691
      %v1708 = vmul.f32 %v1675, %v1692
      %v1709 = vmul.f32 %v1676, %v1693
      %v1710 = vsub.f32 2.0, %v1694
      %v1711 = vsub.f32 2.0, %v1695
      %v1712 = vsub.f32 2.0, %v1696
      %v1713 = vsub.f32 2.0, %v1697
      %v1714 = vsub.f32 2.0, %v1698
      %v1715 = vsub.f32 2.0, %v1699
      %v1716 = vsub.f32 2.0, %v1700
      %v1717 = vsub.f32 2.0, %v1701
      %v1718 = vsub.f32 2.0, %v1702
      %v1719 = vsub.f32 2.0, %v1703
      %v1720 = vsub.f32 2.0, %v1704
      %v1721 = vsub.f32 2.0, %v1705
      %v1722 = vsub.f32 2.0, %v1706
      %v1723 = vsub.f32 2.0, %v1707
      %v1724 = vsub.f32 2.0, %v1708
      %v1725 = vsub.f32 2.0, %v1709
      %v1726 = vmul.f32 %v1678, %v1710
      %v1727 = vmul.f32 %v1679, %v1711
      %v1728 = vmul.f32 %v1680, %v1712
      %v1729 = vmul.f32 %v1681, %v1713
      %v1730 = vmul.f32 %v1682, %v1714
      %v1731 = vmul.f32 %v1683, %v1715
      %v1732 = vmul.f32 %v1684, %v1716
      %v1733 = vmul.f32 %v1685, %v1717
      %v1734 = vmul.f32 %v1686, %v1718
      %v1735 = vmul.f32 %v1687, %v1719
      %v1736 = vmul.f32 %v1688, %v1720
      %v1737 = vmul.f32 %v1689, %v1721
      %v1738 = vmul.f32 %v1690, %v1722
      %v1739 = vmul.f32 %v1691, %v1723
      %v1740 = vmul.f32 %v1692, %v1724
      %v1741 = vmul.f32 %v1693, %v1725
      %v1742 = vmul.f32 %v662, %v1726
      %v1743 = vmul.f32 %v663, %v1727
      %v1744 = vmul.f32 %v664, %v1728
      %v1745 = vmul.f32 %v665, %v1729
      %v1746 = vmul.f32 %v666, %v1730
      %v1747 = vmul.f32 %v667, %v1731
      %v1748 = vmul.f32 %v668, %v1732
      %v1749 = vmul.f32 %v669, %v1733
      %v1750 = vmul.f32 %v670, %v1734
      %v1751 = vmul.f32 %v671, %v1735
      %v1752 = vmul.f32 %v672, %v1736
      %v1753 = vmul.f32 %v673, %v1737
      %v1754 = vmul.f32 %v674, %v1738
      %v1755 = vmul.f32 %v675, %v1739
      %v1756 = vmul.f32 %v676, %v1740
      %v1757 = vmul.f32 %v677, %v1741
      %1758 = vadd.xlane.f32.xlu0 %v1742
      %v1759 = vpop.xlane.xlu0 %1758
      %1760 = vadd.xlane.f32.xlu0 %v1743
      %v1761 = vpop.xlane.xlu0 %1760
      %1762 = vadd.xlane.f32.xlu0 %v1744
      %v1763 = vpop.xlane.xlu0 %1762
      %1764 = vadd.xlane.f32.xlu0 %v1745
      %v1765 = vpop.xlane.xlu0 %1764
      %1766 = vadd.xlane.f32.xlu0 %v1746
      %v1767 = vpop.xlane.xlu0 %1766
      %1768 = vadd.xlane.f32.xlu0 %v1747
      %v1769 = vpop.xlane.xlu0 %1768
      %1770 = vadd.xlane.f32.xlu0 %v1748
      %v1771 = vpop.xlane.xlu0 %1770
      %1772 = vadd.xlane.f32.xlu0 %v1749
      %v1773 = vpop.xlane.xlu0 %1772
      %1774 = vadd.xlane.f32.xlu0 %v1750
      %v1775 = vpop.xlane.xlu0 %1774
      %1776 = vadd.xlane.f32.xlu0 %v1751
      %v1777 = vpop.xlane.xlu0 %1776
      %1778 = vadd.xlane.f32.xlu0 %v1752
      %v1779 = vpop.xlane.xlu0 %1778
      %1780 = vadd.xlane.f32.xlu0 %v1753
      %v1781 = vpop.xlane.xlu0 %1780
      %1782 = vadd.xlane.f32.xlu0 %v1754
      %v1783 = vpop.xlane.xlu0 %1782
      %1784 = vadd.xlane.f32.xlu0 %v1755
      %v1785 = vpop.xlane.xlu0 %1784
      %1786 = vadd.xlane.f32.xlu0 %v1756
      %v1787 = vpop.xlane.xlu0 %1786
      %1788 = vadd.xlane.f32.xlu0 %v1757
      %v1789 = vpop.xlane.xlu0 %1788
      %1806 = vrot.lane.b32.xlu0 %v1661, 112
      %v1807 = vpop.permute.xlu0 %1806
      %1808 = vrot.lane.b32.xlu0 %v1662, 112
      %v1809 = vpop.permute.xlu0 %1808
      %1810 = vrot.lane.b32.xlu0 %v1663, 112
      %v1811 = vpop.permute.xlu0 %1810
      %1812 = vrot.lane.b32.xlu0 %v1664, 112
      %v1813 = vpop.permute.xlu0 %1812
      %1814 = vrot.lane.b32.xlu0 %v1665, 112
      %v1815 = vpop.permute.xlu0 %1814
      %1816 = vrot.lane.b32.xlu0 %v1666, 112
      %v1817 = vpop.permute.xlu0 %1816
      %1818 = vrot.lane.b32.xlu0 %v1667, 112
      %v1819 = vpop.permute.xlu0 %1818
      %1820 = vrot.lane.b32.xlu0 %v1668, 112
      %v1821 = vpop.permute.xlu0 %1820
      %1822 = vrot.lane.b32.xlu0 %v1669, 112
      %v1823 = vpop.permute.xlu0 %1822
      %1824 = vrot.lane.b32.xlu0 %v1670, 112
      %v1825 = vpop.permute.xlu0 %1824
      %1826 = vrot.lane.b32.xlu0 %v1671, 112
      %v1827 = vpop.permute.xlu0 %1826
      %1828 = vrot.lane.b32.xlu0 %v1672, 112
      %v1829 = vpop.permute.xlu0 %1828
      %1830 = vrot.lane.b32.xlu0 %v1673, 112
      %v1831 = vpop.permute.xlu0 %1830
      %1832 = vrot.lane.b32.xlu0 %v1674, 112
      %v1833 = vpop.permute.xlu0 %1832
      %1834 = vrot.lane.b32.xlu0 %v1675, 112
      %v1835 = vpop.permute.xlu0 %1834
      %1836 = vrot.lane.b32.xlu0 %v1676, 112
      %v1837 = vpop.permute.xlu0 %1836
      %v1854 = vmul.f32 %v1661, %v1807
      %v1855 = vmul.f32 %v1662, %v1809
      %v1856 = vmul.f32 %v1663, %v1811
      %v1857 = vmul.f32 %v1664, %v1813
      %v1858 = vmul.f32 %v1665, %v1815
      %v1859 = vmul.f32 %v1666, %v1817
      %v1860 = vmul.f32 %v1667, %v1819
      %v1861 = vmul.f32 %v1668, %v1821
      %v1862 = vmul.f32 %v1669, %v1823
      %v1863 = vmul.f32 %v1670, %v1825
      %v1864 = vmul.f32 %v1671, %v1827
      %v1865 = vmul.f32 %v1672, %v1829
      %v1866 = vmul.f32 %v1673, %v1831
      %v1867 = vmul.f32 %v1674, %v1833
      %v1868 = vmul.f32 %v1675, %v1835
      %v1869 = vmul.f32 %v1676, %v1837
      %1870 = vrot.lane.b32.xlu0 %v1661, 96
      %v1871 = vpop.permute.xlu0 %1870
      %1872 = vrot.lane.b32.xlu0 %v1662, 96
      %v1873 = vpop.permute.xlu0 %1872
      %1874 = vrot.lane.b32.xlu0 %v1663, 96
      %v1875 = vpop.permute.xlu0 %1874
      %1876 = vrot.lane.b32.xlu0 %v1664, 96
      %v1877 = vpop.permute.xlu0 %1876
      %1878 = vrot.lane.b32.xlu0 %v1665, 96
      %v1879 = vpop.permute.xlu0 %1878
      %1880 = vrot.lane.b32.xlu0 %v1666, 96
      %v1881 = vpop.permute.xlu0 %1880
      %1882 = vrot.lane.b32.xlu0 %v1667, 96
      %v1883 = vpop.permute.xlu0 %1882
      %1884 = vrot.lane.b32.xlu0 %v1668, 96
      %v1885 = vpop.permute.xlu0 %1884
      %1886 = vrot.lane.b32.xlu0 %v1669, 96
      %v1887 = vpop.permute.xlu0 %1886
      %1888 = vrot.lane.b32.xlu0 %v1670, 96
      %v1889 = vpop.permute.xlu0 %1888
      %1890 = vrot.lane.b32.xlu0 %v1671, 96
      %v1891 = vpop.permute.xlu0 %1890
      %1892 = vrot.lane.b32.xlu0 %v1672, 96
      %v1893 = vpop.permute.xlu0 %1892
      %1894 = vrot.lane.b32.xlu0 %v1673, 96
      %v1895 = vpop.permute.xlu0 %1894
      %1896 = vrot.lane.b32.xlu0 %v1674, 96
      %v1897 = vpop.permute.xlu0 %1896
      %1898 = vrot.lane.b32.xlu0 %v1675, 96
      %v1899 = vpop.permute.xlu0 %1898
      %1900 = vrot.lane.b32.xlu0 %v1676, 96
      %v1901 = vpop.permute.xlu0 %1900
      %v1918 = vmul.f32 %v1854, %v1871
      %v1919 = vmul.f32 %v1855, %v1873
      %v1920 = vmul.f32 %v1856, %v1875
      %v1921 = vmul.f32 %v1857, %v1877
      %v1922 = vmul.f32 %v1858, %v1879
      %v1923 = vmul.f32 %v1859, %v1881
      %v1924 = vmul.f32 %v1860, %v1883
      %v1925 = vmul.f32 %v1861, %v1885
      %v1926 = vmul.f32 %v1862, %v1887
      %v1927 = vmul.f32 %v1863, %v1889
      %v1928 = vmul.f32 %v1864, %v1891
      %v1929 = vmul.f32 %v1865, %v1893
      %v1930 = vmul.f32 %v1866, %v1895
      %v1931 = vmul.f32 %v1867, %v1897
      %v1932 = vmul.f32 %v1868, %v1899
      %v1933 = vmul.f32 %v1869, %v1901
      %1934 = vrot.lane.b32.xlu0 %v1661, 80
      %v1935 = vpop.permute.xlu0 %1934
      %1936 = vrot.lane.b32.xlu0 %v1662, 80
      %v1937 = vpop.permute.xlu0 %1936
      %1938 = vrot.lane.b32.xlu0 %v1663, 80
      %v1939 = vpop.permute.xlu0 %1938
      %1940 = vrot.lane.b32.xlu0 %v1664, 80
      %v1941 = vpop.permute.xlu0 %1940
      %1942 = vrot.lane.b32.xlu0 %v1665, 80
      %v1943 = vpop.permute.xlu0 %1942
      %1944 = vrot.lane.b32.xlu0 %v1666, 80
      %v1945 = vpop.permute.xlu0 %1944
      %1946 = vrot.lane.b32.xlu0 %v1667, 80
      %v1947 = vpop.permute.xlu0 %1946
      %1948 = vrot.lane.b32.xlu0 %v1668, 80
      %v1949 = vpop.permute.xlu0 %1948
      %1950 = vrot.lane.b32.xlu0 %v1669, 80
      %v1951 = vpop.permute.xlu0 %1950
      %1952 = vrot.lane.b32.xlu0 %v1670, 80
      %v1953 = vpop.permute.xlu0 %1952
      %1954 = vrot.lane.b32.xlu0 %v1671, 80
      %v1955 = vpop.permute.xlu0 %1954
      %1956 = vrot.lane.b32.xlu0 %v1672, 80
      %v1957 = vpop.permute.xlu0 %1956
      %1958 = vrot.lane.b32.xlu0 %v1673, 80
      %v1959 = vpop.permute.xlu0 %1958
      %1960 = vrot.lane.b32.xlu0 %v1674, 80
      %v1961 = vpop.permute.xlu0 %1960
      %1962 = vrot.lane.b32.xlu0 %v1675, 80
      %v1963 = vpop.permute.xlu0 %1962
      %1964 = vrot.lane.b32.xlu0 %v1676, 80
      %v1965 = vpop.permute.xlu0 %1964
      %v1982 = vmul.f32 %v1918, %v1935
      %v1983 = vmul.f32 %v1919, %v1937
      %v1984 = vmul.f32 %v1920, %v1939
      %v1985 = vmul.f32 %v1921, %v1941
      %v1986 = vmul.f32 %v1922, %v1943
      %v1987 = vmul.f32 %v1923, %v1945
      %v1988 = vmul.f32 %v1924, %v1947
      %v1989 = vmul.f32 %v1925, %v1949
      %v1990 = vmul.f32 %v1926, %v1951
      %v1991 = vmul.f32 %v1927, %v1953
      %v1992 = vmul.f32 %v1928, %v1955
      %v1993 = vmul.f32 %v1929, %v1957
      %v1994 = vmul.f32 %v1930, %v1959
      %v1995 = vmul.f32 %v1931, %v1961
      %v1996 = vmul.f32 %v1932, %v1963
      %v1997 = vmul.f32 %v1933, %v1965
      %1998 = vrot.lane.b32.xlu0 %v1661, 64
      %v1999 = vpop.permute.xlu0 %1998
      %2000 = vrot.lane.b32.xlu0 %v1662, 64
      %v2001 = vpop.permute.xlu0 %2000
      %2002 = vrot.lane.b32.xlu0 %v1663, 64
      %v2003 = vpop.permute.xlu0 %2002
      %2004 = vrot.lane.b32.xlu0 %v1664, 64
      %v2005 = vpop.permute.xlu0 %2004
      %2006 = vrot.lane.b32.xlu0 %v1665, 64
      %v2007 = vpop.permute.xlu0 %2006
      %2008 = vrot.lane.b32.xlu0 %v1666, 64
      %v2009 = vpop.permute.xlu0 %2008
      %2010 = vrot.lane.b32.xlu0 %v1667, 64
      %v2011 = vpop.permute.xlu0 %2010
      %2012 = vrot.lane.b32.xlu0 %v1668, 64
      %v2013 = vpop.permute.xlu0 %2012
      %2014 = vrot.lane.b32.xlu0 %v1669, 64
      %v2015 = vpop.permute.xlu0 %2014
      %2016 = vrot.lane.b32.xlu0 %v1670, 64
      %v2017 = vpop.permute.xlu0 %2016
      %2018 = vrot.lane.b32.xlu0 %v1671, 64
      %v2019 = vpop.permute.xlu0 %2018
      %2020 = vrot.lane.b32.xlu0 %v1672, 64
      %v2021 = vpop.permute.xlu0 %2020
      %2022 = vrot.lane.b32.xlu0 %v1673, 64
      %v2023 = vpop.permute.xlu0 %2022
      %2024 = vrot.lane.b32.xlu0 %v1674, 64
      %v2025 = vpop.permute.xlu0 %2024
      %2026 = vrot.lane.b32.xlu0 %v1675, 64
      %v2027 = vpop.permute.xlu0 %2026
      %2028 = vrot.lane.b32.xlu0 %v1676, 64
      %v2029 = vpop.permute.xlu0 %2028
      %v2046 = vmul.f32 %v1982, %v1999
      %v2047 = vmul.f32 %v1983, %v2001
      %v2048 = vmul.f32 %v1984, %v2003
      %v2049 = vmul.f32 %v1985, %v2005
      %v2050 = vmul.f32 %v1986, %v2007
      %v2051 = vmul.f32 %v1987, %v2009
      %v2052 = vmul.f32 %v1988, %v2011
      %v2053 = vmul.f32 %v1989, %v2013
      %v2054 = vmul.f32 %v1990, %v2015
      %v2055 = vmul.f32 %v1991, %v2017
      %v2056 = vmul.f32 %v1992, %v2019
      %v2057 = vmul.f32 %v1993, %v2021
      %v2058 = vmul.f32 %v1994, %v2023
      %v2059 = vmul.f32 %v1995, %v2025
      %v2060 = vmul.f32 %v1996, %v2027
      %v2061 = vmul.f32 %v1997, %v2029
      %2062 = vrot.lane.b32.xlu0 %v1661, 48
      %v2063 = vpop.permute.xlu0 %2062
      %2064 = vrot.lane.b32.xlu0 %v1662, 48
      %v2065 = vpop.permute.xlu0 %2064
      %2066 = vrot.lane.b32.xlu0 %v1663, 48
      %v2067 = vpop.permute.xlu0 %2066
      %2068 = vrot.lane.b32.xlu0 %v1664, 48
      %v2069 = vpop.permute.xlu0 %2068
      %2070 = vrot.lane.b32.xlu0 %v1665, 48
      %v2071 = vpop.permute.xlu0 %2070
      %2072 = vrot.lane.b32.xlu0 %v1666, 48
      %v2073 = vpop.permute.xlu0 %2072
      %2074 = vrot.lane.b32.xlu0 %v1667, 48
      %v2075 = vpop.permute.xlu0 %2074
      %2076 = vrot.lane.b32.xlu0 %v1668, 48
      %v2077 = vpop.permute.xlu0 %2076
      %2078 = vrot.lane.b32.xlu0 %v1669, 48
      %v2079 = vpop.permute.xlu0 %2078
      %2080 = vrot.lane.b32.xlu0 %v1670, 48
      %v2081 = vpop.permute.xlu0 %2080
      %2082 = vrot.lane.b32.xlu0 %v1671, 48
      %v2083 = vpop.permute.xlu0 %2082
      %2084 = vrot.lane.b32.xlu0 %v1672, 48
      %v2085 = vpop.permute.xlu0 %2084
      %2086 = vrot.lane.b32.xlu0 %v1673, 48
      %v2087 = vpop.permute.xlu0 %2086
      %2088 = vrot.lane.b32.xlu0 %v1674, 48
      %v2089 = vpop.permute.xlu0 %2088
      %2090 = vrot.lane.b32.xlu0 %v1675, 48
      %v2091 = vpop.permute.xlu0 %2090
      %2092 = vrot.lane.b32.xlu0 %v1676, 48
      %v2093 = vpop.permute.xlu0 %2092
      %v2110 = vmul.f32 %v2046, %v2063
      %v2111 = vmul.f32 %v2047, %v2065
      %v2112 = vmul.f32 %v2048, %v2067
      %v2113 = vmul.f32 %v2049, %v2069
      %v2114 = vmul.f32 %v2050, %v2071
      %v2115 = vmul.f32 %v2051, %v2073
      %v2116 = vmul.f32 %v2052, %v2075
      %v2117 = vmul.f32 %v2053, %v2077
      %v2118 = vmul.f32 %v2054, %v2079
      %v2119 = vmul.f32 %v2055, %v2081
      %v2120 = vmul.f32 %v2056, %v2083
      %v2121 = vmul.f32 %v2057, %v2085
      %v2122 = vmul.f32 %v2058, %v2087
      %v2123 = vmul.f32 %v2059, %v2089
      %v2124 = vmul.f32 %v2060, %v2091
      %v2125 = vmul.f32 %v2061, %v2093
      %2126 = vrot.lane.b32.xlu0 %v1661, 32
      %v2127 = vpop.permute.xlu0 %2126
      %2128 = vrot.lane.b32.xlu0 %v1662, 32
      %v2129 = vpop.permute.xlu0 %2128
      %2130 = vrot.lane.b32.xlu0 %v1663, 32
      %v2131 = vpop.permute.xlu0 %2130
      %2132 = vrot.lane.b32.xlu0 %v1664, 32
      %v2133 = vpop.permute.xlu0 %2132
      %2134 = vrot.lane.b32.xlu0 %v1665, 32
      %v2135 = vpop.permute.xlu0 %2134
      %2136 = vrot.lane.b32.xlu0 %v1666, 32
      %v2137 = vpop.permute.xlu0 %2136
      %2138 = vrot.lane.b32.xlu0 %v1667, 32
      %v2139 = vpop.permute.xlu0 %2138
      %2140 = vrot.lane.b32.xlu0 %v1668, 32
      %v2141 = vpop.permute.xlu0 %2140
      %2142 = vrot.lane.b32.xlu0 %v1669, 32
      %v2143 = vpop.permute.xlu0 %2142
      %2144 = vrot.lane.b32.xlu0 %v1670, 32
      %v2145 = vpop.permute.xlu0 %2144
      %2146 = vrot.lane.b32.xlu0 %v1671, 32
      %v2147 = vpop.permute.xlu0 %2146
      %2148 = vrot.lane.b32.xlu0 %v1672, 32
      %v2149 = vpop.permute.xlu0 %2148
      %2150 = vrot.lane.b32.xlu0 %v1673, 32
      %v2151 = vpop.permute.xlu0 %2150
      %2152 = vrot.lane.b32.xlu0 %v1674, 32
      %v2153 = vpop.permute.xlu0 %2152
      %2154 = vrot.lane.b32.xlu0 %v1675, 32
      %v2155 = vpop.permute.xlu0 %2154
      %2156 = vrot.lane.b32.xlu0 %v1676, 32
      %v2157 = vpop.permute.xlu0 %2156
      %v2174 = vmul.f32 %v2110, %v2127
      %v2175 = vmul.f32 %v2111, %v2129
      %v2176 = vmul.f32 %v2112, %v2131
      %v2177 = vmul.f32 %v2113, %v2133
      %v2178 = vmul.f32 %v2114, %v2135
      %v2179 = vmul.f32 %v2115, %v2137
      %v2180 = vmul.f32 %v2116, %v2139
      %v2181 = vmul.f32 %v2117, %v2141
      %v2182 = vmul.f32 %v2118, %v2143
      %v2183 = vmul.f32 %v2119, %v2145
      %v2184 = vmul.f32 %v2120, %v2147
      %v2185 = vmul.f32 %v2121, %v2149
      %v2186 = vmul.f32 %v2122, %v2151
      %v2187 = vmul.f32 %v2123, %v2153
      %v2188 = vmul.f32 %v2124, %v2155
      %v2189 = vmul.f32 %v2125, %v2157
      %2190 = vrot.lane.b32.xlu0 %v1661, 16
      %v2191 = vpop.permute.xlu0 %2190
      %2192 = vrot.lane.b32.xlu0 %v1662, 16
      %v2193 = vpop.permute.xlu0 %2192
      %2194 = vrot.lane.b32.xlu0 %v1663, 16
      %v2195 = vpop.permute.xlu0 %2194
      %2196 = vrot.lane.b32.xlu0 %v1664, 16
      %v2197 = vpop.permute.xlu0 %2196
      %2198 = vrot.lane.b32.xlu0 %v1665, 16
      %v2199 = vpop.permute.xlu0 %2198
      %2200 = vrot.lane.b32.xlu0 %v1666, 16
      %v2201 = vpop.permute.xlu0 %2200
      %2202 = vrot.lane.b32.xlu0 %v1667, 16
      %v2203 = vpop.permute.xlu0 %2202
      %2204 = vrot.lane.b32.xlu0 %v1668, 16
      %v2205 = vpop.permute.xlu0 %2204
      %2206 = vrot.lane.b32.xlu0 %v1669, 16
      %v2207 = vpop.permute.xlu0 %2206
      %2208 = vrot.lane.b32.xlu0 %v1670, 16
      %v2209 = vpop.permute.xlu0 %2208
      %2210 = vrot.lane.b32.xlu0 %v1671, 16
      %v2211 = vpop.permute.xlu0 %2210
      %2212 = vrot.lane.b32.xlu0 %v1672, 16
      %v2213 = vpop.permute.xlu0 %2212
      %2214 = vrot.lane.b32.xlu0 %v1673, 16
      %v2215 = vpop.permute.xlu0 %2214
      %2216 = vrot.lane.b32.xlu0 %v1674, 16
      %v2217 = vpop.permute.xlu0 %2216
      %2218 = vrot.lane.b32.xlu0 %v1675, 16
      %v2219 = vpop.permute.xlu0 %2218
      %2220 = vrot.lane.b32.xlu0 %v1676, 16
      %v2221 = vpop.permute.xlu0 %2220
      %v2238 = vmul.f32 %v2174, %v2191
      %v2239 = vmul.f32 %v2175, %v2193
      %v2240 = vmul.f32 %v2176, %v2195
      %v2241 = vmul.f32 %v2177, %v2197
      %v2242 = vmul.f32 %v2178, %v2199
      %v2243 = vmul.f32 %v2179, %v2201
      %v2244 = vmul.f32 %v2180, %v2203
      %v2245 = vmul.f32 %v2181, %v2205
      %v2246 = vmul.f32 %v2182, %v2207
      %v2247 = vmul.f32 %v2183, %v2209
      %v2248 = vmul.f32 %v2184, %v2211
      %v2249 = vmul.f32 %v2185, %v2213
      %v2250 = vmul.f32 %v2186, %v2215
      %v2251 = vmul.f32 %v2187, %v2217
      %v2252 = vmul.f32 %v2188, %v2219
      %v2253 = vmul.f32 %v2189, %v2221
      %v2254 = vlog2.pop %v2238
      %v2255 = vmul.f32 %v2254, 0.6931472
      %v2256 = vlog2.pop %v2239
      %v2257 = vmul.f32 %v2256, 0.6931472
      %v2258 = vlog2.pop %v2240
      %v2259 = vmul.f32 %v2258, 0.6931472
      %v2260 = vlog2.pop %v2241
      %v2261 = vmul.f32 %v2260, 0.6931472
      %v2262 = vlog2.pop %v2242
      %v2263 = vmul.f32 %v2262, 0.6931472
      %v2264 = vlog2.pop %v2243
      %v2265 = vmul.f32 %v2264, 0.6931472
      %v2266 = vlog2.pop %v2244
      %v2267 = vmul.f32 %v2266, 0.6931472
      %v2268 = vlog2.pop %v2245
      %v2269 = vmul.f32 %v2268, 0.6931472
      %v2270 = vlog2.pop %v2246
      %v2271 = vmul.f32 %v2270, 0.6931472
      %v2272 = vlog2.pop %v2247
      %v2273 = vmul.f32 %v2272, 0.6931472
      %v2274 = vlog2.pop %v2248
      %v2275 = vmul.f32 %v2274, 0.6931472
      %v2276 = vlog2.pop %v2249
      %v2277 = vmul.f32 %v2276, 0.6931472
      %v2278 = vlog2.pop %v2250
      %v2279 = vmul.f32 %v2278, 0.6931472
      %v2280 = vlog2.pop %v2251
      %v2281 = vmul.f32 %v2280, 0.6931472
      %v2282 = vlog2.pop %v2252
      %v2283 = vmul.f32 %v2282, 0.6931472
      %v2284 = vlog2.pop %v2253
      %v2285 = vmul.f32 %v2284, 0.6931472
      %v2286 = vsel %vm1395, %v2255, 0.0
      %2287 = vadd.xlane.f32.xlu0 %v2286
      %v2288 = vpop.xlane.xlu0 %2287
      %v2289 = vsel %vm1395, %v2257, 0.0
      %2290 = vadd.xlane.f32.xlu0 %v2289
      %v2291 = vpop.xlane.xlu0 %2290
      %v2292 = vsel %vm1395, %v2259, 0.0
      %2293 = vadd.xlane.f32.xlu0 %v2292
      %v2294 = vpop.xlane.xlu0 %2293
      %v2295 = vsel %vm1395, %v2261, 0.0
      %2296 = vadd.xlane.f32.xlu0 %v2295
      %v2297 = vpop.xlane.xlu0 %2296
      %v2298 = vsel %vm1395, %v2263, 0.0
      %2299 = vadd.xlane.f32.xlu0 %v2298
      %v2300 = vpop.xlane.xlu0 %2299
      %v2301 = vsel %vm1395, %v2265, 0.0
      %2302 = vadd.xlane.f32.xlu0 %v2301
      %v2303 = vpop.xlane.xlu0 %2302
      %v2304 = vsel %vm1395, %v2267, 0.0
      %2305 = vadd.xlane.f32.xlu0 %v2304
      %v2306 = vpop.xlane.xlu0 %2305
      %v2307 = vsel %vm1395, %v2269, 0.0
      %2308 = vadd.xlane.f32.xlu0 %v2307
      %v2309 = vpop.xlane.xlu0 %2308
      %v2310 = vsel %vm1395, %v2271, 0.0
      %2311 = vadd.xlane.f32.xlu0 %v2310
      %v2312 = vpop.xlane.xlu0 %2311
      %v2313 = vsel %vm1395, %v2273, 0.0
      %2314 = vadd.xlane.f32.xlu0 %v2313
      %v2315 = vpop.xlane.xlu0 %2314
      %v2316 = vsel %vm1395, %v2275, 0.0
      %2317 = vadd.xlane.f32.xlu0 %v2316
      %v2318 = vpop.xlane.xlu0 %2317
      %v2319 = vsel %vm1395, %v2277, 0.0
      %2320 = vadd.xlane.f32.xlu0 %v2319
      %v2321 = vpop.xlane.xlu0 %2320
      %v2322 = vsel %vm1395, %v2279, 0.0
      %2323 = vadd.xlane.f32.xlu0 %v2322
      %v2324 = vpop.xlane.xlu0 %2323
      %v2325 = vsel %vm1395, %v2281, 0.0
      %2326 = vadd.xlane.f32.xlu0 %v2325
      %v2327 = vpop.xlane.xlu0 %2326
      %v2328 = vsel %vm1395, %v2283, 0.0
      %2329 = vadd.xlane.f32.xlu0 %v2328
      %v2330 = vpop.xlane.xlu0 %2329
      %v2331 = vsel %vm1395, %v2285, 0.0
      %2332 = vadd.xlane.f32.xlu0 %v2331
      %v2333 = vpop.xlane.xlu0 %2332
      %v2334 = vadd.f32 %v1759, %v2288
      %v2335 = vadd.f32 %v1761, %v2291
      %v2336 = vadd.f32 %v1763, %v2294
      %v2337 = vadd.f32 %v1765, %v2297
      %v2338 = vadd.f32 %v1767, %v2300
      %v2339 = vadd.f32 %v1769, %v2303
      %v2340 = vadd.f32 %v1771, %v2306
      %v2341 = vadd.f32 %v1773, %v2309
      %v2342 = vadd.f32 %v1775, %v2312
      %v2343 = vadd.f32 %v1777, %v2315
      %v2344 = vadd.f32 %v1779, %v2318
      %v2345 = vadd.f32 %v1781, %v2321
      %v2346 = vadd.f32 %v1783, %v2324
      %v2347 = vadd.f32 %v1785, %v2327
      %v2348 = vadd.f32 %v1787, %v2330
      %v2349 = vadd.f32 %v1789, %v2333
      %v2366 = vlaneseq
      %v2367 = vshrl.u32 %v2366, 7
      %v2368 = vsub.s32 %v1477, %v2367
      %v2369 = vrot.slane %v2334, %v2368
      %v2370 = vlaneseq
      %v2371 = vshrl.u32 %v2370, 7
      %v2372 = vsub.s32 %v1482, %v2371
      %v2373 = vrot.slane %v2335, %v2372
      %v2374 = vsel %vm1487, %v2373, %v2369
      %v2375 = vlaneseq
      %v2376 = vshrl.u32 %v2375, 7
      %v2377 = vsub.s32 %v1477, %v2376
      %v2378 = vrot.slane %v2336, %v2377
      %v2379 = vlaneseq
      %v2380 = vshrl.u32 %v2379, 7
      %v2381 = vsub.s32 %v1482, %v2380
      %v2382 = vrot.slane %v2337, %v2381
      %v2383 = vsel %vm1487, %v2382, %v2378
      %v2384 = vlaneseq
      %v2385 = vshrl.u32 %v2384, 7
      %v2386 = vsub.s32 %v1477, %v2385
      %v2387 = vrot.slane %v2338, %v2386
      %v2388 = vlaneseq
      %v2389 = vshrl.u32 %v2388, 7
      %v2390 = vsub.s32 %v1482, %v2389
      %v2391 = vrot.slane %v2339, %v2390
      %v2392 = vsel %vm1487, %v2391, %v2387
      %v2393 = vlaneseq
      %v2394 = vshrl.u32 %v2393, 7
      %v2395 = vsub.s32 %v1477, %v2394
      %v2396 = vrot.slane %v2340, %v2395
      %v2397 = vlaneseq
      %v2398 = vshrl.u32 %v2397, 7
      %v2399 = vsub.s32 %v1482, %v2398
      %v2400 = vrot.slane %v2341, %v2399
      %v2401 = vsel %vm1487, %v2400, %v2396
      %v2402 = vlaneseq
      %v2403 = vshrl.u32 %v2402, 7
      %v2404 = vsub.s32 %v1477, %v2403
      %v2405 = vrot.slane %v2342, %v2404
      %v2406 = vlaneseq
      %v2407 = vshrl.u32 %v2406, 7
      %v2408 = vsub.s32 %v1482, %v2407
      %v2409 = vrot.slane %v2343, %v2408
      %v2410 = vsel %vm1487, %v2409, %v2405
      %v2411 = vlaneseq
      %v2412 = vshrl.u32 %v2411, 7
      %v2413 = vsub.s32 %v1477, %v2412
      %v2414 = vrot.slane %v2344, %v2413
      %v2415 = vlaneseq
      %v2416 = vshrl.u32 %v2415, 7
      %v2417 = vsub.s32 %v1482, %v2416
      %v2418 = vrot.slane %v2345, %v2417
      %v2419 = vsel %vm1487, %v2418, %v2414
      %v2420 = vlaneseq
      %v2421 = vshrl.u32 %v2420, 7
      %v2422 = vsub.s32 %v1477, %v2421
      %v2423 = vrot.slane %v2346, %v2422
      %v2424 = vlaneseq
      %v2425 = vshrl.u32 %v2424, 7
      %v2426 = vsub.s32 %v1482, %v2425
      %v2427 = vrot.slane %v2347, %v2426
      %v2428 = vsel %vm1487, %v2427, %v2423
      %v2429 = vlaneseq
      %v2430 = vshrl.u32 %v2429, 7
      %v2431 = vsub.s32 %v1477, %v2430
      %v2432 = vrot.slane %v2348, %v2431
      %v2433 = vlaneseq
      %v2434 = vshrl.u32 %v2433, 7
      %v2435 = vsub.s32 %v1482, %v2434
      %v2436 = vrot.slane %v2349, %v2435
      %v2437 = vsel %vm1487, %v2436, %v2432
      %v2438 = vsel %vm1552, %v2383, %v2374
      %v2439 = vsel %vm1554, %v2392, %v2438
      %v2440 = vsel %vm1556, %v2401, %v2439
      %v2441 = vsel %vm1558, %v2410, %v2440
      %v2442 = vsel %vm1560, %v2419, %v2441
      %v2443 = vsel %vm1562, %v2428, %v2442
      %v2444 = vsel %vm1564, %v2437, %v2443
      %v2446 = vadd.f32 %v1677, %v2444
      %2447 = vst.msk [vmem:[#allocation3] sm:$0xff] %vm1395, %v2446
      // Predicated region
      $region61: #{_forward_arrays.1} parent=51 // pred_check
        %p2448 = pneg %p531
      $region62: #{_forward_arrays.1} parent=51 // pred_check_branch
        %2450 = sbr.rel (%p2448) target = $region64
      $region63: #{_forward_arrays.1} parent=51 // pred_region
        %v2451 = vld [vmem:[#allocation2] sm:$0xff]
        %v2452 = vmul.f32 %v2451, -0.5
        %v2453 = vadd.f32 %v2452, -7.351508
        %v2454 = vmul.f32 %v2453, 1.442695
        %v2455 = vpow.pop %v2454
        %v2456 = vld [vmem:[#allocation3] sm:$0xff]
        %v2457 = vmul.f32 %v2456, -0.5
        %v2458 = vadd.f32 %v2457, -7.351508
        %v2459 = vmul.f32 %v2458, 1.442695
        %v2460 = vpow.pop %v2459
        %v2461 = vld [vmem:[%s515] sm:$0xff]
        %v2462 = vld [vmem:[%s520] sm:$0xff]
        %v2463 = vld [vmem:[%s520 + $0x8] sm:$0xff]
        %2465 = vrot.lane.b32.xlu0 %v2460, 16
        %v2466 = vpop.permute.xlu0 %2465
        %v2468 = vsel %vm1395, %v2455, %v2466
        %2469 = vxpose.xlu0.b32.start [1/16] %v2461, 128
        %2470 = vxpose.xlu0.b32.cont [2/16] 0.0, 128
        %2471 = vxpose.xlu0.b32.cont [3/16] 0.0, 128
        %2472 = vxpose.xlu0.b32.cont [4/16] 0.0, 128
        %2473 = vxpose.xlu0.b32.cont [5/16] 0.0, 128
        %2474 = vxpose.xlu0.b32.cont [6/16] 0.0, 128
        %2475 = vxpose.xlu0.b32.cont [7/16] 0.0, 128
        %2476 = vxpose.xlu0.b32.cont [8/16] 0.0, 128
        %2477 = vxpose.xlu0.b32.cont [9/16] 0.0, 128
        %2478 = vxpose.xlu0.b32.cont [10/16] 0.0, 128
        %2479 = vxpose.xlu0.b32.cont [11/16] 0.0, 128
        %2480 = vxpose.xlu0.b32.cont [12/16] 0.0, 128
        %2481 = vxpose.xlu0.b32.cont [13/16] 0.0, 128
        %2482 = vxpose.xlu0.b32.cont [14/16] 0.0, 128
        %2483 = vxpose.xlu0.b32.cont [15/16] 0.0, 128
        %2484 = vxpose.xlu0.b32.end [16/16] 0.0, 128
        %v2485 = vpop.trf.xlu0
        %v2486 = vpop.trf.xlu0
        %v2487 = vpop.trf.xlu0
        %v2488 = vpop.trf.xlu0
        %v2489 = vpop.trf.xlu0
        %v2490 = vpop.trf.xlu0
        %v2491 = vpop.trf.xlu0
        %v2492 = vpop.trf.xlu0
        %v2493 = vpop.trf.xlu0
        %v2494 = vpop.trf.xlu0
        %v2495 = vpop.trf.xlu0
        %v2496 = vpop.trf.xlu0
        %v2497 = vpop.trf.xlu0
        %v2498 = vpop.trf.xlu0
        %v2499 = vpop.trf.xlu0
        %v2500 = vpop.trf.xlu0
        %vm2501 = vcmask 64512
        %v2503 = vsel %vm2501, %v2485, 0
        %2505 = vmatprep.subr.mxu0 0.0
        %2506 = vmatpush1.msra.mxu0 0.0
        %2507 = vmatprep.subr.mxu0 0.0
        %2508 = vmatpush1.msra.mxu0 0.0
        %2509 = vmatprep.subr.mxu0 0.0
        %2510 = vmatpush1.msra.mxu0 0.0
        %2511 = vmatprep.subr.mxu0 0.0
        %2512 = vmatpush1.msra.mxu0 0.0
        %2513 = vmatprep.subr.mxu0 0.0
        %2514 = vmatpush1.msra.mxu0 0.0
        %2515 = vmatprep.subr.mxu0 0.0
        %2516 = vmatpush1.msra.mxu0 0.0
        %2517 = vmatprep.subr.mxu0 0.0
        %2518 = vmatpush1.msra.mxu0 0.0
        %2519 = vmatprep.subr.mxu0 0.0
        %2520 = vmatpush1.msra.mxu0 0.0
        %2521 = vmatprep.subr.mxu0 0.0
        %2522 = vmatpush1.msra.mxu0 0.0
        %2523 = vmatprep.subr.mxu0 0.0
        %2524 = vmatpush1.msra.mxu0 0.0
        %2525 = vmatprep.subr.mxu0 0.0
        %2526 = vmatpush1.msra.mxu0 0.0
        %2527 = vmatprep.subr.mxu0 0.0
        %2528 = vmatpush1.msra.mxu0 0.0
        %2529 = vmatprep.subr.mxu0 0.0
        %2530 = vmatpush1.msra.mxu0 0.0
        %2531 = vmatprep.subr.mxu0 0.0
        %2532 = vmatpush1.msra.mxu0 0.0
        %2533 = vmatprep.subr.mxu0 0.0
        %2534 = vmatpush1.msra.mxu0 0.0
        %2535 = vmatprep.subr.mxu0 0.0
        %2536 = vmatpush1.msra.mxu0 %v2468
        %2537 = vmatprep.subr.mxu0 0.0
        %2538 = vmatpush2.msra.mxu0 0.0
        %2539 = vmatprep.subr.mxu0 0.0
        %2540 = vmatpush2.msra.mxu0 0.0
        %2541 = vmatprep.subr.mxu0 0.0
        %2542 = vmatpush2.msra.mxu0 0.0
        %2543 = vmatprep.subr.mxu0 0.0
        %2544 = vmatpush2.msra.mxu0 0.0
        %2545 = vmatprep.subr.mxu0 0.0
        %2546 = vmatpush2.msra.mxu0 0.0
        %2547 = vmatprep.subr.mxu0 0.0
        %2548 = vmatpush2.msra.mxu0 0.0
        %2549 = vmatprep.subr.mxu0 0.0
        %2550 = vmatpush2.msra.mxu0 0.0
        %2551 = vmatprep.subr.mxu0 0.0
        %2552 = vmatpush2.msra.mxu0 0.0
        %2553 = vmatprep.subr.mxu0 0.0
        %2554 = vmatpush2.msra.mxu0 0.0
        %2555 = vmatprep.subr.mxu0 0.0
        %2556 = vmatpush2.msra.mxu0 0.0
        %2557 = vmatprep.subr.mxu0 0.0
        %2558 = vmatpush2.msra.mxu0 0.0
        %2559 = vmatprep.subr.mxu0 0.0
        %2560 = vmatpush2.msra.mxu0 0.0
        %2561 = vmatprep.subr.mxu0 0.0
        %2562 = vmatpush2.msra.mxu0 0.0
        %2563 = vmatprep.subr.mxu0 0.0
        %2564 = vmatpush2.msra.mxu0 0.0
        %2565 = vmatprep.subr.mxu0 0.0
        %2566 = vmatpush2.msra.mxu0 0.0
        %2567 = vmatprep.subr.mxu0 0.0
        %2568 = vmatpush2.msra.mxu0 0.0
        %2569 = vmatprep.mubr.f32.mxu0 0.0
        %2570 = vmatmul.mubr.f32.gmra.mxu0 %v2503
        %v2571 = vpop.f32.mrf.mxu0
        %v2572 = vadd.f32 0.0, %v2571
        %v2573 = vpop.f32.mrf.mxu0
        %2574 = vdwg.mxu0
        %v2575 = vld [vmem:[%s525] sm:$0xff]
        %v2577 = vsel %vm1395, %v2572, 0
        %2579 = vmatprep.subr.mxu0 0.0
        %2580 = vmatpush1.msra.mxu0 0.0
        %2581 = vmatprep.subr.mxu0 0.0
        %2582 = vmatpush1.msra.mxu0 0.0
        %2583 = vmatprep.subr.mxu0 0.0
        %2584 = vmatpush1.msra.mxu0 0.0
        %2585 = vmatprep.subr.mxu0 0.0
        %2586 = vmatpush1.msra.mxu0 0.0
        %2587 = vmatprep.subr.mxu0 0.0
        %2588 = vmatpush1.msra.mxu0 0.0
        %2589 = vmatprep.subr.mxu0 0.0
        %2590 = vmatpush1.msra.mxu0 0.0
        %2591 = vmatprep.subr.mxu0 0.0
        %2592 = vmatpush1.msra.mxu0 0.0
        %2593 = vmatprep.subr.mxu0 0.0
        %2594 = vmatpush1.msra.mxu0 0.0
        %2595 = vmatprep.subr.mxu0 0.0
        %2596 = vmatpush1.msra.mxu0 0.0
        %2597 = vmatprep.subr.mxu0 0.0
        %2598 = vmatpush1.msra.mxu0 0.0
        %2599 = vmatprep.subr.mxu0 0.0
        %2600 = vmatpush1.msra.mxu0 0.0
        %2601 = vmatprep.subr.mxu0 0.0
        %2602 = vmatpush1.msra.mxu0 0.0
        %2603 = vmatprep.subr.mxu0 0.0
        %2604 = vmatpush1.msra.mxu0 0.0
        %2605 = vmatprep.subr.mxu0 0.0
        %2606 = vmatpush1.msra.mxu0 0.0
        %2607 = vmatprep.subr.mxu0 0.0
        %2608 = vmatpush1.msra.mxu0 %v2463
        %2609 = vmatprep.subr.mxu0 0.0
        %2610 = vmatpush1.msra.mxu0 %v2462
        %2611 = vmatprep.subr.mxu0 0.0
        %2612 = vmatpush2.msra.mxu0 0.0
        %2613 = vmatprep.subr.mxu0 0.0
        %2614 = vmatpush2.msra.mxu0 0.0
        %2615 = vmatprep.subr.mxu0 0.0
        %2616 = vmatpush2.msra.mxu0 0.0
        %2617 = vmatprep.subr.mxu0 0.0
        %2618 = vmatpush2.msra.mxu0 0.0
        %2619 = vmatprep.subr.mxu0 0.0
        %2620 = vmatpush2.msra.mxu0 0.0
        %2621 = vmatprep.subr.mxu0 0.0
        %2622 = vmatpush2.msra.mxu0 0.0
        %2623 = vmatprep.subr.mxu0 0.0
        %2624 = vmatpush2.msra.mxu0 0.0
        %2625 = vmatprep.subr.mxu0 0.0
        %2626 = vmatpush2.msra.mxu0 0.0
        %2627 = vmatprep.subr.mxu0 0.0
        %2628 = vmatpush2.msra.mxu0 0.0
        %2629 = vmatprep.subr.mxu0 0.0
        %2630 = vmatpush2.msra.mxu0 0.0
        %2631 = vmatprep.subr.mxu0 0.0
        %2632 = vmatpush2.msra.mxu0 0.0
        %2633 = vmatprep.subr.mxu0 0.0
        %2634 = vmatpush2.msra.mxu0 0.0
        %2635 = vmatprep.subr.mxu0 0.0
        %2636 = vmatpush2.msra.mxu0 0.0
        %2637 = vmatprep.subr.mxu0 0.0
        %2638 = vmatpush2.msra.mxu0 0.0
        %2639 = vmatprep.subr.mxu0 0.0
        %2640 = vmatpush2.msra.mxu0 0.0
        %2641 = vmatprep.subr.mxu0 0.0
        %2642 = vmatpush2.msra.mxu0 0.0
        %2643 = vmatprep.mubr.f32.mxu0 0.0
        %2644 = vmatmul.mubr.f32.gmra.mxu0 %v2577
        %v2645 = vpop.f32.mrf.mxu0
        %v2646 = vadd.f32 0.0, %v2645
        %v2647 = vpop.f32.mrf.mxu0
        %2648 = vdwg.mxu0
        %v2649 = vadd.f32 %v2575, %v2646
        %2650 = vst.msk [vmem:[%s525] sm:$0xff] %vm2501, %v2649
        %v2651 = vld [vmem:[%s529] sm:$0xff]
        %2652 = vrot.lane.b32.xlu0 %v2572, 112
        %v2653 = vpop.permute.xlu0 %2652
        %v2654 = vsel %vm1395, %v2653, 0
        %2656 = vmatprep.subr.mxu0 0.0
        %2657 = vmatpush1.msra.mxu0 0.0
        %2658 = vmatprep.subr.mxu0 0.0
        %2659 = vmatpush1.msra.mxu0 0.0
        %2660 = vmatprep.subr.mxu0 0.0
        %2661 = vmatpush1.msra.mxu0 0.0
        %2662 = vmatprep.subr.mxu0 0.0
        %2663 = vmatpush1.msra.mxu0 0.0
        %2664 = vmatprep.subr.mxu0 0.0
        %2665 = vmatpush1.msra.mxu0 0.0
        %2666 = vmatprep.subr.mxu0 0.0
        %2667 = vmatpush1.msra.mxu0 0.0
        %2668 = vmatprep.subr.mxu0 0.0
        %2669 = vmatpush1.msra.mxu0 0.0
        %2670 = vmatprep.subr.mxu0 0.0
        %2671 = vmatpush1.msra.mxu0 0.0
        %2672 = vmatprep.subr.mxu0 0.0
        %2673 = vmatpush1.msra.mxu0 0.0
        %2674 = vmatprep.subr.mxu0 0.0
        %2675 = vmatpush1.msra.mxu0 0.0
        %2676 = vmatprep.subr.mxu0 0.0
        %2677 = vmatpush1.msra.mxu0 0.0
        %2678 = vmatprep.subr.mxu0 0.0
        %2679 = vmatpush1.msra.mxu0 0.0
        %2680 = vmatprep.subr.mxu0 0.0
        %2681 = vmatpush1.msra.mxu0 0.0
        %2682 = vmatprep.subr.mxu0 0.0
        %2683 = vmatpush1.msra.mxu0 0.0
        %2684 = vmatprep.subr.mxu0 0.0
        %2685 = vmatpush1.msra.mxu0 %v2463
        %2686 = vmatprep.subr.mxu0 0.0
        %2687 = vmatpush1.msra.mxu0 %v2462
        %2688 = vmatprep.subr.mxu0 0.0
        %2689 = vmatpush2.msra.mxu0 0.0
        %2690 = vmatprep.subr.mxu0 0.0
        %2691 = vmatpush2.msra.mxu0 0.0
        %2692 = vmatprep.subr.mxu0 0.0
        %2693 = vmatpush2.msra.mxu0 0.0
        %2694 = vmatprep.subr.mxu0 0.0
        %2695 = vmatpush2.msra.mxu0 0.0
        %2696 = vmatprep.subr.mxu0 0.0
        %2697 = vmatpush2.msra.mxu0 0.0
        %2698 = vmatprep.subr.mxu0 0.0
        %2699 = vmatpush2.msra.mxu0 0.0
        %2700 = vmatprep.subr.mxu0 0.0
        %2701 = vmatpush2.msra.mxu0 0.0
        %2702 = vmatprep.subr.mxu0 0.0
        %2703 = vmatpush2.msra.mxu0 0.0
        %2704 = vmatprep.subr.mxu0 0.0
        %2705 = vmatpush2.msra.mxu0 0.0
        %2706 = vmatprep.subr.mxu0 0.0
        %2707 = vmatpush2.msra.mxu0 0.0
        %2708 = vmatprep.subr.mxu0 0.0
        %2709 = vmatpush2.msra.mxu0 0.0
        %2710 = vmatprep.subr.mxu0 0.0
        %2711 = vmatpush2.msra.mxu0 0.0
        %2712 = vmatprep.subr.mxu0 0.0
        %2713 = vmatpush2.msra.mxu0 0.0
        %2714 = vmatprep.subr.mxu0 0.0
        %2715 = vmatpush2.msra.mxu0 0.0
        %2716 = vmatprep.subr.mxu0 0.0
        %2717 = vmatpush2.msra.mxu0 0.0
        %2718 = vmatprep.subr.mxu0 0.0
        %2719 = vmatpush2.msra.mxu0 0.0
        %2720 = vmatprep.mubr.f32.mxu0 0.0
        %2721 = vmatmul.mubr.f32.gmra.mxu0 %v2654
        %v2722 = vpop.f32.mrf.mxu0
        %v2723 = vadd.f32 0.0, %v2722
        %v2724 = vpop.f32.mrf.mxu0
        %2725 = vdwg.mxu0
        %v2726 = vadd.f32 %v2651, %v2723
        %2727 = vst.msk [vmem:[%s529] sm:$0xff] %vm2501, %v2726
      $region64: #{_forward_arrays.1} parent=51 // pred_fallthru
        _
      %p2728 = scmp.lt.s32.totalorder %s26, 1
      %s2729 = scalar_select %p2728, %s26, 1
      %s2730 = smul.addr %s2729, 8
      %s2731 = scalar_lea.vmem %s8, %s2730
      %p2732 = scmp.lt.s32.totalorder %s26, 1
      %s2733 = scalar_select %p2732, %s26, 1
      %s2734 = smul.addr %s2733, 8
      %s2735 = scalar_lea.vmem %s9, %s2734
      // Predicated region
      $region65: #{_forward_arrays.1} parent=51 // pred_check
        %p2736 = pneg %p272
      $region66: #{_forward_arrays.1} parent=51 // pred_check_branch
        %2738 = sbr.rel (%p2736) target = $region68
      $region67: #{_forward_arrays.1} parent=51 // pred_region
        _
      $region68: #{_forward_arrays.1} parent=51 // pred_fallthru
        _
      // Predicated region
      $region69: #{_forward_arrays.1} parent=51 // pred_check
        %p2739 = pneg %p298
      $region70: #{_forward_arrays.1} parent=51 // pred_check_branch
        %2741 = sbr.rel (%p2739) target = $region72
      $region71: #{_forward_arrays.1} parent=51 // pred_region
        _
      $region72: #{_forward_arrays.1} parent=51 // pred_fallthru
        _
    $region52: #{_forward_arrays.1} parent=5 // pred_fallthru
      _
    %p2742 = scmp.le.s32.totalorder 2, %s16
    // Predicated region
    $region73: #{_forward_arrays.1} parent=5 // pred_check
      %p2743 = pneg %p2742
    $region74: #{_forward_arrays.1} parent=5 // pred_check_branch
      %2745 = sbr.rel (%p2743) target = $region76
    $region75: #{_forward_arrays.1} parent=5 // pred_region
      %s2746 = ssub.s32 %s16, 2
      // Predicated region
      $region77: #{_forward_arrays.1} parent=75 // pred_check
        %p2747 = pneg %p278
      $region78: #{_forward_arrays.1} parent=75 // pred_check_branch
        %2749 = sbr.rel (%p2747) target = $region80
      $region79: #{_forward_arrays.1} parent=75 // pred_region
        %p2750 = scmp.lt.s32.totalorder %s29, 1
        %s2751 = scalar_select %p2750, %s29, 1
        %s2752 = smul.addr %s2751, 8
        %s2753 = scalar_lea.vmem %s8, %s2752
      $region80: #{_forward_arrays.1} parent=75 // pred_fallthru
        _
      // Predicated region
      $region81: #{_forward_arrays.1} parent=75 // pred_check
        %p2754 = pneg %p304
      $region82: #{_forward_arrays.1} parent=75 // pred_check_branch
        %2756 = sbr.rel (%p2754) target = $region84
      $region83: #{_forward_arrays.1} parent=75 // pred_region
        %p2757 = scmp.lt.s32.totalorder %s29, 1
        %s2758 = scalar_select %p2757, %s29, 1
        %s2759 = smul.addr %s2758, 8
        %s2760 = scalar_lea.vmem %s9, %s2759
      $region84: #{_forward_arrays.1} parent=75 // pred_fallthru
        _
    $region76: #{_forward_arrays.1} parent=5 // pred_fallthru
      _
  $region6: #{_forward_arrays.1} parent=0 // loop_footer
    %s20 = sadd.s32 1, %s16
  $region7: #{_forward_arrays.1} parent=0 // loop_footer_branch
    %15 = sbr.rel target = $region3
  $region8: #{_forward_arrays.1} parent=0 // loop_exit
    _

</llo_original>
